<compile_context>
chip_gen: v5e
topology: v5e:2x2
jax: 0.10.0
libtpu: 0.0.40
codegen_flags: <defaults>
</compile_context>

<pallas_src>
import math

import jax
import jax.numpy as jnp
from jax.experimental import pallas as pl
from jax.experimental.pallas import tpu as pltpu

LANE = 128
SUBLANE = 8


def _round_up(x: int, m: int) -> int:
    return (x + m - 1) // m * m


def f2_kernel(x_ref, w0t_ref, b0_ref, w1t_ref, b1_ref, w2t_ref, b2_ref, o_ref):
    cdt = w0t_ref.dtype  # MXU operand dtype (bf16 or f32)
    # In-kernel cast: x is read from HBM exactly once as f32, cast here.
    xb = x_ref[...].astype(cdt)
    # Layer 0: (tn, d) @ (d, h0p) -> f32 acc; bias + ReLU in f32.
    a0 = jnp.dot(xb, w0t_ref[...], preferred_element_type=jnp.float32)
    a0 = jnp.maximum(a0 + b0_ref[...], 0.0)
    # Layer 1: (tn, h0p) @ (h0p, h1p)
    a1 = jnp.dot(a0.astype(cdt), w1t_ref[...], preferred_element_type=jnp.float32)
    a1 = jnp.maximum(a1 + b1_ref[...], 0.0)
    # Layer 2 (logits, no activation): (tn, h1p) @ (h1p, k_pad)
    a2 = jnp.dot(a1.astype(cdt), w2t_ref[...], preferred_element_type=jnp.float32)
    o_ref[...] = (a2 + b2_ref[...]).astype(o_ref.dtype)


def prepare_f2_params(w0, b0, w1, b1, w2, b2, compute_dtype=jnp.bfloat16):
    """One-time glue: pre-transpose weights, reshape biases to row vectors,
    zero-pad all hidden/output widths (h0, h1, k) to lane-dense multiples of
    128, and cast MXU operands to compute_dtype. Returns (params_tuple, k)."""
    h0, d = w0.shape
    h1 = w1.shape[0]
    k = w2.shape[0]
    h0p = _round_up(h0, LANE)
    h1p = _round_up(h1, LANE)
    kp = _round_up(k, LANE)

    w0t = jnp.zeros((d, h0p), compute_dtype).at[:, :h0].set(
        jnp.transpose(w0).astype(compute_dtype))
    w1t = jnp.zeros((h0p, h1p), compute_dtype).at[:h0, :h1].set(
        jnp.transpose(w1).astype(compute_dtype))
    w2t = jnp.zeros((h1p, kp), compute_dtype).at[:h1, :k].set(
        jnp.transpose(w2).astype(compute_dtype))

    b0r = jnp.zeros((1, h0p), jnp.float32).at[:, :h0].set(b0.astype(jnp.float32))
    b1r = jnp.zeros((1, h1p), jnp.float32).at[:, :h1].set(b1.astype(jnp.float32))
    b2r = jnp.zeros((1, kp), jnp.float32).at[:, :k].set(b2.astype(jnp.float32))
    return (w0t, b0r, w1t, b1r, w2t, b2r), k


def _f2_pallas_call(x, params, *, tn, out_dtype, single_buffer_weights):
    w0t, b0r, w1t, b1r, w2t, b2r = params
    n, d = x.shape
    h0p = w0t.shape[1]
    h1p = w1t.shape[1]
    kp = w2t.shape[1]
    grid = (pl.cdiv(n, tn),)  # ragged tail handled by Pallas boundary masking

    def const_spec(shape):
        # Constant index_map => VMEM-resident across the whole grid; single
        # buffering avoids allocating a useless second buffer.
        if single_buffer_weights:
            return pl.BlockSpec(shape, lambda i: (0, 0),
                                pipeline_mode=pl.Buffered(1))
        return pl.BlockSpec(shape, lambda i: (0, 0))

    w_isz = jnp.dtype(w0t.dtype).itemsize
    o_isz = jnp.dtype(out_dtype).itemsize
    weight_bytes = (d * h0p + h0p * h1p + h1p * kp) * w_isz
    bias_bytes = (h0p + h1p + kp) * 4
    flops = 2 * n * (d * h0p + h0p * h1p + h1p * kp)
    bytes_accessed = n * d * 4 + weight_bytes + bias_bytes + n * kp * o_isz
    cost = pl.CostEstimate(flops=flops, transcendentals=0,
                           bytes_accessed=bytes_accessed)

    wbuf = 1 if single_buffer_weights else 2
    vmem_est = (2 * tn * d * 4                   # x tiles (f32, double-buffered)
                + 2 * tn * kp * o_isz            # out tiles (double-buffered)
                + wbuf * (weight_bytes + bias_bytes)
                + 3 * tn * max(h0p, h1p, kp) * 4 # a0/a1/a2 intermediates
                + (4 << 20))                     # slack
    vmem_limit = int(max(32 << 20, min(vmem_est, 100 << 20)))

    return pl.pallas_call(
        f2_kernel,
        out_shape=jax.ShapeDtypeStruct((n, kp), out_dtype),
        grid=grid,
        in_specs=[
            pl.BlockSpec((tn, d), lambda i: (i, 0)),   # x: tiled over batch
            const_spec((d, h0p)),                      # weights/biases resident
            const_spec((1, h0p)),
            const_spec((h0p, h1p)),
            const_spec((1, h1p)),
            const_spec((h1p, kp)),
            const_spec((1, kp)),
        ],
        out_specs=pl.BlockSpec((tn, kp), lambda i: (i, 0)),
        compiler_params=pltpu.CompilerParams(
            dimension_semantics=("parallel",),
            vmem_limit_bytes=vmem_limit),
        cost_estimate=cost,
    )(x, w0t, b0r, w1t, b1r, w2t, b2r)


def f2_forward(x, params, *, k, tile_n=2048, out_dtype=jnp.bfloat16):
    """x: (n, d) float32 (NOT pre-cast / pre-padded); params from prepare_f2_params.
    Returns (n, k) logits in out_dtype."""
    n, d = x.shape
    # Batch tile: big (amortizes the ~0.35us/step overhead) but guaranteeing
    # >=2 grid steps when possible so both v7x TensorCores get work; multiple of 8.
    tn = max(SUBLANE, min(tile_n, _round_up(pl.cdiv(n, 2), SUBLANE)))
    try:
        out = _f2_pallas_call(x, params, tn=tn, out_dtype=out_dtype,
                              single_buffer_weights=True)
    except Exception:
        # Fallback if this JAX version rejects pipeline_mode=pl.Buffered(1).
        out = _f2_pallas_call(x, params, tn=tn, out_dtype=out_dtype,
                              single_buffer_weights=False)
    # NOTE: when a downstream op follows (softmax / argmax / loss), consume the
    # padded (n, 128) block directly instead of paying this extra slice pass.
    return out[:, :k]


def init_f2_params(key, h0, h1, d, k):
    """Deterministic U(-alpha, alpha) init, matching the PyTorch __init__ shapes."""
    a0 = 1.0 / math.sqrt(d)
    a1 = 1.0 / math.sqrt(h0)
    a2 = 1.0 / math.sqrt(h1)
    ks = jax.random.split(key, 6)
    w0 = jax.random.uniform(ks[0], (h0, d), jnp.float32, -a0, a0)
    b0 = jax.random.uniform(ks[1], (h0,), jnp.float32, -a0, a0)
    w1 = jax.random.uniform(ks[2], (h1, h0), jnp.float32, -a1, a1)
    b1 = jax.random.uniform(ks[3], (h1,), jnp.float32, -a1, a1)
    w2 = jax.random.uniform(ks[4], (k, h1), jnp.float32, -a2, a2)
    b2 = jax.random.uniform(ks[5], (k,), jnp.float32, -a2, a2)
    return w0, b0, w1, b1, w2, b2


if __name__ == "__main__":
    # Small shapes consistent with the module: batch n, features d, hiddens h0/h1,
    # classes k. n is NOT a multiple of 8 or the tile to exercise the ragged-tail
    # (masked boundary block) path; the tn heuristic yields a 2-step grid.
    n, d, h0, h1, k = 200, 128, 64, 32, 10
    tile_n = 128

    key = jax.random.PRNGKey(0)
    kx, kp = jax.random.split(key)
    x = jax.random.normal(kx, (n, d), jnp.float32)
    w0, b0, w1, b1, w2, b2 = init_f2_params(kp, h0, h1, d, k)

    # Reference in plain JAX f32 (mirrors the PyTorch forward exactly).
    inner0 = w0 @ x.T + b0[:, None]
    inner1 = w1 @ jnp.maximum(inner0, 0.0) + b1[:, None]
    inner2 = w2 @ jnp.maximum(inner1, 0.0) + b2[:, None]
    ref = inner2.T

    # 1) f32 operands + f32 output: exact-semantics check.
    params_f32, k_out = prepare_f2_params(w0, b0, w1, b1, w2, b2,
                                          compute_dtype=jnp.float32)
    out_f32 = f2_forward(x, params_f32, k=k_out, tile_n=tile_n,
                         out_dtype=jnp.float32)
    out_f32 = jax.block_until_ready(out_f32)
    assert out_f32.shape == (n, k)
    assert jnp.allclose(out_f32, ref, atol=1e-5, rtol=1e-5)

    # 2) bf16 operands + bf16 output (f32 accumulate / epilogue): perf config.
    params_bf16, k_out = prepare_f2_params(w0, b0, w1, b1, w2, b2,
                                           compute_dtype=jnp.bfloat16)
    out_bf16 = f2_forward(x, params_bf16, k=k_out, tile_n=tile_n,
                          out_dtype=jnp.bfloat16)
    out_bf16 = jax.block_until_ready(out_bf16)
    assert out_bf16.shape == (n, k)
    assert jnp.allclose(out_bf16.astype(jnp.float32), ref, atol=5e-2, rtol=5e-2)

    print("KERNEL_OK")
</pallas_src>

<mosaic_0001>
module attributes {stable_mosaic.version = 11 : i64} {
  func.func @f2_kernel(%arg0: i32, %arg1: memref<104x128xf32, #tpu.memory_space<vmem>>, %arg2: memref<128x128xf32, #tpu.memory_space<vmem>>, %arg3: memref<1x128xf32, #tpu.memory_space<vmem>>, %arg4: memref<128x128xf32, #tpu.memory_space<vmem>>, %arg5: memref<1x128xf32, #tpu.memory_space<vmem>>, %arg6: memref<128x128xf32, #tpu.memory_space<vmem>>, %arg7: memref<1x128xf32, #tpu.memory_space<vmem>>, %arg8: memref<104x128xf32, #tpu.memory_space<vmem>>) attributes {dimension_semantics = [#tpu.dimension_semantics<parallel>], iteration_bounds = array<i64: 2>, scalar_prefetch = 0 : i64, scratch_operands = 0 : i64, tpu.core_type = #tpu.core_type<tc>, window_params = [{transform_indices = @transform_0, window_bounds = array<i64: 104, 128>}, {pipeline_mode = #tpu.pipeline_mode<synchronous>, transform_indices = @transform_1, window_bounds = array<i64: 128, 128>}, {pipeline_mode = #tpu.pipeline_mode<synchronous>, transform_indices = @transform_2, window_bounds = array<i64: 1, 128>}, {pipeline_mode = #tpu.pipeline_mode<synchronous>, transform_indices = @transform_3, window_bounds = array<i64: 128, 128>}, {pipeline_mode = #tpu.pipeline_mode<synchronous>, transform_indices = @transform_4, window_bounds = array<i64: 1, 128>}, {pipeline_mode = #tpu.pipeline_mode<synchronous>, transform_indices = @transform_5, window_bounds = array<i64: 128, 128>}, {pipeline_mode = #tpu.pipeline_mode<synchronous>, transform_indices = @transform_6, window_bounds = array<i64: 1, 128>}, {transform_indices = @transform_7, window_bounds = array<i64: 104, 128>}]} {
    %c0 = arith.constant 0 : index
    %c0_0 = arith.constant 0 : index
    %0 = vector.load %arg1[%c0, %c0_0] : memref<104x128xf32, #tpu.memory_space<vmem>>, vector<104x128xf32>
    %c0_1 = arith.constant 0 : index
    %c0_2 = arith.constant 0 : index
    %1 = vector.load %arg2[%c0_1, %c0_2] : memref<128x128xf32, #tpu.memory_space<vmem>>, vector<128x128xf32>
    %cst = arith.constant dense<0.000000e+00> : vector<104x128xf32>
    %2 = tpu.matmul %0, %1, %cst {dimension_numbers = #tpu.dot_dimension_numbers<[1], [0], [0], [1], [0, 0, 1, 1], [], []>} : vector<104x128xf32>, vector<128x128xf32>, vector<104x128xf32> -> vector<104x128xf32>
    %c0_3 = arith.constant 0 : index
    %c0_4 = arith.constant 0 : index
    %3 = vector.load %arg3[%c0_3, %c0_4] : memref<1x128xf32, #tpu.memory_space<vmem>>, vector<1x128xf32>
    %4 = vector.broadcast %3 : vector<1x128xf32> to vector<104x128xf32>
    %5 = arith.addf %2, %4 : vector<104x128xf32>
    %cst_5 = arith.constant 0.000000e+00 : f32
    %6 = vector.broadcast %cst_5 : f32 to vector<104x128xf32>
    %7 = arith.maximumf %5, %6 : vector<104x128xf32>
    %c0_6 = arith.constant 0 : index
    %c0_7 = arith.constant 0 : index
    %8 = vector.load %arg4[%c0_6, %c0_7] : memref<128x128xf32, #tpu.memory_space<vmem>>, vector<128x128xf32>
    %cst_8 = arith.constant dense<0.000000e+00> : vector<104x128xf32>
    %9 = tpu.matmul %7, %8, %cst_8 {dimension_numbers = #tpu.dot_dimension_numbers<[1], [0], [0], [1], [0, 0, 1, 1], [], []>} : vector<104x128xf32>, vector<128x128xf32>, vector<104x128xf32> -> vector<104x128xf32>
    %c0_9 = arith.constant 0 : index
    %c0_10 = arith.constant 0 : index
    %10 = vector.load %arg5[%c0_9, %c0_10] : memref<1x128xf32, #tpu.memory_space<vmem>>, vector<1x128xf32>
    %11 = vector.broadcast %10 : vector<1x128xf32> to vector<104x128xf32>
    %12 = arith.addf %9, %11 : vector<104x128xf32>
    %cst_11 = arith.constant 0.000000e+00 : f32
    %13 = vector.broadcast %cst_11 : f32 to vector<104x128xf32>
    %14 = arith.maximumf %12, %13 : vector<104x128xf32>
    %c0_12 = arith.constant 0 : index
    %c0_13 = arith.constant 0 : index
    %15 = vector.load %arg6[%c0_12, %c0_13] : memref<128x128xf32, #tpu.memory_space<vmem>>, vector<128x128xf32>
    %cst_14 = arith.constant dense<0.000000e+00> : vector<104x128xf32>
    %16 = tpu.matmul %14, %15, %cst_14 {dimension_numbers = #tpu.dot_dimension_numbers<[1], [0], [0], [1], [0, 0, 1, 1], [], []>} : vector<104x128xf32>, vector<128x128xf32>, vector<104x128xf32> -> vector<104x128xf32>
    %c0_15 = arith.constant 0 : index
    %c0_16 = arith.constant 0 : index
    %17 = vector.load %arg7[%c0_15, %c0_16] : memref<1x128xf32, #tpu.memory_space<vmem>>, vector<1x128xf32>
    %18 = vector.broadcast %17 : vector<1x128xf32> to vector<104x128xf32>
    %19 = arith.addf %16, %18 : vector<104x128xf32>
    %c0_17 = arith.constant 0 : index
    %c0_18 = arith.constant 0 : index
    %20 = vector.load %arg8[%c0_17, %c0_18] : memref<104x128xf32, #tpu.memory_space<vmem>>, vector<104x128xf32>
    tpu.vector_store %arg8[%c0_17, %c0_18], %19 {strides = array<i32>} : memref<104x128xf32, #tpu.memory_space<vmem>>, vector<104x128xf32>,
    return
  }
  func.func @transform_0(%arg0: i32) -> (i32, i32) {
    %c0_i32 = arith.constant 0 : i32
    %c0_i32_0 = arith.constant 0 : i32
    return %arg0, %c0_i32 : i32, i32
  }
  func.func @transform_1(%arg0: i32) -> (i32, i32) {
    %c0_i32 = arith.constant 0 : i32
    %c0_i32_0 = arith.constant 0 : i32
    %c0_i32_1 = arith.constant 0 : i32
    return %c0_i32, %c0_i32_0 : i32, i32
  }
  func.func @transform_2(%arg0: i32) -> (i32, i32) {
    %c0_i32 = arith.constant 0 : i32
    %c0_i32_0 = arith.constant 0 : i32
    %c0_i32_1 = arith.constant 0 : i32
    return %c0_i32, %c0_i32_0 : i32, i32
  }
  func.func @transform_3(%arg0: i32) -> (i32, i32) {
    %c0_i32 = arith.constant 0 : i32
    %c0_i32_0 = arith.constant 0 : i32
    %c0_i32_1 = arith.constant 0 : i32
    return %c0_i32, %c0_i32_0 : i32, i32
  }
  func.func @transform_4(%arg0: i32) -> (i32, i32) {
    %c0_i32 = arith.constant 0 : i32
    %c0_i32_0 = arith.constant 0 : i32
    %c0_i32_1 = arith.constant 0 : i32
    return %c0_i32, %c0_i32_0 : i32, i32
  }
  func.func @transform_5(%arg0: i32) -> (i32, i32) {
    %c0_i32 = arith.constant 0 : i32
    %c0_i32_0 = arith.constant 0 : i32
    %c0_i32_1 = arith.constant 0 : i32
    return %c0_i32, %c0_i32_0 : i32, i32
  }
  func.func @transform_6(%arg0: i32) -> (i32, i32) {
    %c0_i32 = arith.constant 0 : i32
    %c0_i32_0 = arith.constant 0 : i32
    %c0_i32_1 = arith.constant 0 : i32
    return %c0_i32, %c0_i32_0 : i32, i32
  }
  func.func @transform_7(%arg0: i32) -> (i32, i32) {
    %c0_i32 = arith.constant 0 : i32
    %c0_i32_0 = arith.constant 0 : i32
    return %arg0, %c0_i32 : i32, i32
  }
}

module attributes {stable_mosaic.version = 11 : i64} {
  func.func @f2_kernel(%arg0: i32, %arg1: memref<104x128xf32, #tpu.memory_space<vmem>>, %arg2: memref<128x128xf32, #tpu.memory_space<vmem>>, %arg3: memref<1x128xf32, #tpu.memory_space<vmem>>, %arg4: memref<128x128xf32, #tpu.memory_space<vmem>>, %arg5: memref<1x128xf32, #tpu.memory_space<vmem>>, %arg6: memref<128x128xf32, #tpu.memory_space<vmem>>, %arg7: memref<1x128xf32, #tpu.memory_space<vmem>>, %arg8: memref<104x128xf32, #tpu.memory_space<vmem>>) attributes {dimension_semantics = [#tpu.dimension_semantics<parallel>], iteration_bounds = array<i64: 2>, scalar_prefetch = 0 : i64, scratch_operands = 0 : i64, tpu.core_type = #tpu.core_type<tc>, window_params = [{transform_indices = @transform_0, window_bounds = array<i64: 104, 128>}, {pipeline_mode = #tpu.pipeline_mode<synchronous>, transform_indices = @transform_1, window_bounds = array<i64: 128, 128>}, {pipeline_mode = #tpu.pipeline_mode<synchronous>, transform_indices = @transform_2, window_bounds = array<i64: 1, 128>}, {pipeline_mode = #tpu.pipeline_mode<synchronous>, transform_indices = @transform_3, window_bounds = array<i64: 128, 128>}, {pipeline_mode = #tpu.pipeline_mode<synchronous>, transform_indices = @transform_4, window_bounds = array<i64: 1, 128>}, {pipeline_mode = #tpu.pipeline_mode<synchronous>, transform_indices = @transform_5, window_bounds = array<i64: 128, 128>}, {pipeline_mode = #tpu.pipeline_mode<synchronous>, transform_indices = @transform_6, window_bounds = array<i64: 1, 128>}, {transform_indices = @transform_7, window_bounds = array<i64: 104, 128>}]} {
    %c0 = arith.constant 0 : index
    %c0_0 = arith.constant 0 : index
    %0 = vector.load %arg1[%c0, %c0_0] : memref<104x128xf32, #tpu.memory_space<vmem>>, vector<104x128xf32>
    %c0_1 = arith.constant 0 : index
    %c0_2 = arith.constant 0 : index
    %1 = vector.load %arg2[%c0_1, %c0_2] : memref<128x128xf32, #tpu.memory_space<vmem>>, vector<128x128xf32>
    %cst = arith.constant dense<0.000000e+00> : vector<104x128xf32>
    %2 = tpu.matmul %0, %1, %cst {dimension_numbers = #tpu.dot_dimension_numbers<[1], [0], [0], [1], [0, 0, 1, 1], [], []>} : vector<104x128xf32>, vector<128x128xf32>, vector<104x128xf32> -> vector<104x128xf32>
    %c0_3 = arith.constant 0 : index
    %c0_4 = arith.constant 0 : index
    %3 = vector.load %arg3[%c0_3, %c0_4] : memref<1x128xf32, #tpu.memory_space<vmem>>, vector<1x128xf32>
    %4 = vector.broadcast %3 : vector<1x128xf32> to vector<104x128xf32>
    %5 = arith.addf %2, %4 : vector<104x128xf32>
    %cst_5 = arith.constant 0.000000e+00 : f32
    %6 = vector.broadcast %cst_5 : f32 to vector<104x128xf32>
    %7 = arith.maximumf %5, %6 : vector<104x128xf32>
    %c0_6 = arith.constant 0 : index
    %c0_7 = arith.constant 0 : index
    %8 = vector.load %arg4[%c0_6, %c0_7] : memref<128x128xf32, #tpu.memory_space<vmem>>, vector<128x128xf32>
    %cst_8 = arith.constant dense<0.000000e+00> : vector<104x128xf32>
    %9 = tpu.matmul %7, %8, %cst_8 {dimension_numbers = #tpu.dot_dimension_numbers<[1], [0], [0], [1], [0, 0, 1, 1], [], []>} : vector<104x128xf32>, vector<128x128xf32>, vector<104x128xf32> -> vector<104x128xf32>
    %c0_9 = arith.constant 0 : index
    %c0_10 = arith.constant 0 : index
    %10 = vector.load %arg5[%c0_9, %c0_10] : memref<1x128xf32, #tpu.memory_space<vmem>>, vector<1x128xf32>
    %11 = vector.broadcast %10 : vector<1x128xf32> to vector<104x128xf32>
    %12 = arith.addf %9, %11 : vector<104x128xf32>
    %cst_11 = arith.constant 0.000000e+00 : f32
    %13 = vector.broadcast %cst_11 : f32 to vector<104x128xf32>
    %14 = arith.maximumf %12, %13 : vector<104x128xf32>
    %c0_12 = arith.constant 0 : index
    %c0_13 = arith.constant 0 : index
    %15 = vector.load %arg6[%c0_12, %c0_13] : memref<128x128xf32, #tpu.memory_space<vmem>>, vector<128x128xf32>
    %cst_14 = arith.constant dense<0.000000e+00> : vector<104x128xf32>
    %16 = tpu.matmul %14, %15, %cst_14 {dimension_numbers = #tpu.dot_dimension_numbers<[1], [0], [0], [1], [0, 0, 1, 1], [], []>} : vector<104x128xf32>, vector<128x128xf32>, vector<104x128xf32> -> vector<104x128xf32>
    %c0_15 = arith.constant 0 : index
    %c0_16 = arith.constant 0 : index
    %17 = vector.load %arg7[%c0_15, %c0_16] : memref<1x128xf32, #tpu.memory_space<vmem>>, vector<1x128xf32>
    %18 = vector.broadcast %17 : vector<1x128xf32> to vector<104x128xf32>
    %19 = arith.addf %16, %18 : vector<104x128xf32>
    %c0_17 = arith.constant 0 : index
    %c0_18 = arith.constant 0 : index
    %20 = vector.load %arg8[%c0_17, %c0_18] : memref<104x128xf32, #tpu.memory_space<vmem>>, vector<104x128xf32>
    tpu.vector_store %arg8[%c0_17, %c0_18], %19 {strides = array<i32>} : memref<104x128xf32, #tpu.memory_space<vmem>>, vector<104x128xf32>,
    return
  }
  func.func @transform_0(%arg0: i32) -> (i32, i32) {
    %c0_i32 = arith.constant 0 : i32
    %c0_i32_0 = arith.constant 0 : i32
    return %arg0, %c0_i32 : i32, i32
  }
  func.func @transform_1(%arg0: i32) -> (i32, i32) {
    %c0_i32 = arith.constant 0 : i32
    %c0_i32_0 = arith.constant 0 : i32
    %c0_i32_1 = arith.constant 0 : i32
    return %c0_i32, %c0_i32_0 : i32, i32
  }
  func.func @transform_2(%arg0: i32) -> (i32, i32) {
    %c0_i32 = arith.constant 0 : i32
    %c0_i32_0 = arith.constant 0 : i32
    %c0_i32_1 = arith.constant 0 : i32
    return %c0_i32, %c0_i32_0 : i32, i32
  }
  func.func @transform_3(%arg0: i32) -> (i32, i32) {
    %c0_i32 = arith.constant 0 : i32
    %c0_i32_0 = arith.constant 0 : i32
    %c0_i32_1 = arith.constant 0 : i32
    return %c0_i32, %c0_i32_0 : i32, i32
  }
  func.func @transform_4(%arg0: i32) -> (i32, i32) {
    %c0_i32 = arith.constant 0 : i32
    %c0_i32_0 = arith.constant 0 : i32
    %c0_i32_1 = arith.constant 0 : i32
    return %c0_i32, %c0_i32_0 : i32, i32
  }
  func.func @transform_5(%arg0: i32) -> (i32, i32) {
    %c0_i32 = arith.constant 0 : i32
    %c0_i32_0 = arith.constant 0 : i32
    %c0_i32_1 = arith.constant 0 : i32
    return %c0_i32, %c0_i32_0 : i32, i32
  }
  func.func @transform_6(%arg0: i32) -> (i32, i32) {
    %c0_i32 = arith.constant 0 : i32
    %c0_i32_0 = arith.constant 0 : i32
    %c0_i32_1 = arith.constant 0 : i32
    return %c0_i32, %c0_i32_0 : i32, i32
  }
  func.func @transform_7(%arg0: i32) -> (i32, i32) {
    %c0_i32 = arith.constant 0 : i32
    %c0_i32_0 = arith.constant 0 : i32
    return %arg0, %c0_i32 : i32, i32
  }
}

</mosaic_0001>

<llo_original>
// kernel: tpu_custom_call.1
$region0: #{tpu_custom_call.1}
  #allocation0 [shape = 'u32[]', space=smem, size = 0x4, offset = 0x4, fixed_abs, tag = 'smem constant byte address 0x4 - core index']
  #allocation1 [shape = 'u32[72,128]{1,0:T(1,128)}', space=vmem, size = 0x9000, scoped, tag = 'internal scratch']
  %s0 = inlined_call_operand.hbm [shape: f32[200,128], index: 0, kind: input, shape index: {}]
  %s1 = inlined_call_operand.hbm [shape: f32[128,128], index: 1, kind: input, shape index: {}]
  %s2 = inlined_call_operand.vmem [shape: f32[1,128], index: 2, kind: input, shape index: {}]
  %s3 = inlined_call_operand.hbm [shape: f32[128,128], index: 3, kind: input, shape index: {}]
  %s4 = inlined_call_operand.vmem [shape: f32[1,128], index: 4, kind: input, shape index: {}]
  %s5 = inlined_call_operand.hbm [shape: f32[128,128], index: 5, kind: input, shape index: {}]
  %s6 = inlined_call_operand.vmem [shape: f32[1,128], index: 6, kind: input, shape index: {}]
  %s7 = inlined_call_operand.hbm [shape: f32[200,128], index: 7, kind: output, shape index: {}]
  %s8 = sld [smem:[#allocation0]]
  $region77: #{tpu_custom_call.1} parent=0
    _
  %s10 = ssub.s32 1, %s8
  %s11 = scalar_select 0, %s10, %s8
  $region1: #{tpu_custom_call.1} parent=0
    #allocation2 [shape = 'u8[106496]{0}', space=vmem, size = 0x1a000, scoped, tag = 'input window, operand 0']
    #allocation3 [shape = 's32[2]{0}', space=sflag, size = 0x8, scoped, tag = 'scoped memory for tpu_custom_call.1']
    #allocation4 [shape = 's32[2]{0}', space=sflag, size = 0x8, scoped, tag = 'scoped memory for tpu_custom_call.1']
    #allocation5 [shape = 'u8[65536]{0}', space=vmem, size = 0x10000, scoped, tag = 'input window, operand 1, single buffered']
    #allocation6 [shape = 's32[1]{0}', space=sflag, size = 0x4, scoped, tag = 'scoped memory for tpu_custom_call.1']
    #allocation7 [shape = 'u8[65536]{0}', space=vmem, size = 0x10000, scoped, tag = 'input window, operand 3, single buffered']
    #allocation8 [shape = 'u8[65536]{0}', space=vmem, size = 0x10000, scoped, tag = 'input window, operand 5, single buffered']
    #allocation9 [shape = 's32[1]{0}', space=sflag, size = 0x4, scoped, tag = 'scoped memory for tpu_custom_call.1']
    #allocation10 [shape = 'u8[106496]{0}', space=vmem, size = 0x1a000, scoped, tag = 'output window, operand 0']
    %12 = vsyncpa [#allocation3], 0
    %s13 = scalar_lea.sflag [#allocation3], 1
    %14 = vsyncpa %s13, 0
    %15 = vsyncpa [#allocation6], 0
    %16 = vsyncpa [#allocation9], 0
    %17 = vsyncpa [#allocation4], 0
    %s18 = scalar_lea.sflag [#allocation4], 1
    %19 = vsyncpa %s18, 0
    loop: start=0, step=1, limit=4
    $region2: #{tpu_custom_call.1} parent=1 // loop_pre_header
      _
    $region3: #{tpu_custom_call.1} parent=1 // loop_header
      %s21 = sphi 0, %s25
      %p22 = scmp.ge.s32.totalorder %s21, 4
      %s31 = sphi 0, %s33
      %s34 = sphi 0, %s31
      %s35 = sphi 0, %s34
      %s51 = sphi 0, %s35
      %s55 = sphi 0, %s55
      %s57 = sphi 0, %s55
      %s58 = sphi 0, %s57
      %s72 = sphi 0, %s58
      %s76 = sphi 0, %s76
      %s78 = sphi 0, %s76
      %s79 = sphi 0, %s78
      %s93 = sphi 0, %s79
      %s97 = sphi 0, %s97
      %s99 = sphi 0, %s97
      %s100 = sphi 0, %s99
      %s114 = sphi 0, %s100
      %s118 = sphi 0, %s118
      %s120 = sphi 0, %s118
      %s121 = sphi 0, %s120
      %s135 = sphi 0, %s121
      %s139 = sphi 0, %s139
      %s141 = sphi 0, %s139
      %s142 = sphi 0, %s141
      %s156 = sphi 0, %s142
      %s160 = sphi 0, %s160
      %s162 = sphi 0, %s160
      %s163 = sphi 0, %s162
      %s177 = sphi 0, %s163
      %s183 = sphi 0, %s185
      %s186 = sphi 0, %s183
      %s187 = sphi 0, %s186
      %s203 = sphi 0, %s187
    $region4: #{tpu_custom_call.1} parent=1 // loop_header_branch
      %24 = sbr.rel (%p22) target = $region8
    $region5: #{tpu_custom_call.1} parent=1 // loop_body
      %s26 = ssub.s32 %s21, 1
      %s27 = ssub.s32 %s21, 2
      %s28 = sadd.s32 %s21, 1
      %s29 = ssub.s32 %s21, %s28
      %p30 = scmp.eq.s32.totalorder %s29, 0
      %s32 = sadd.s32 %s31, 1
      %s33 = scalar_select %p30, %s31, %s32
      %p36 = pneg %p30
      %p37 = scmp.eq.s32.totalorder %s21, 1
      %p38 = por %p36, %p37
      %p39 = scmp.ne.s32.totalorder %s31, %s34
      %p40 = scmp.eq.s32.totalorder %s21, 0
      %p41 = por %p39, %p40
      %p42 = scmp.ne.s32.totalorder %s31, %s34
      %p43 = scmp.eq.s32.totalorder %s26, 1
      %p44 = por %p42, %p43
      %p45 = scmp.ne.s32.totalorder %s34, %s35
      %p46 = scmp.eq.s32.totalorder %s26, 0
      %p47 = por %p45, %p46
      %p48 = scmp.ne.s32.totalorder %s34, %s35
      %p49 = scmp.eq.s32.totalorder %s27, 1
      %p50 = por %p48, %p49
      %p52 = scmp.ne.s32.totalorder %s35, %s51
      %p53 = scmp.eq.s32.totalorder %s27, 0
      %p54 = por %p52, %p53
      %s56 = sadd.s32 %s55, 1
      %p59 = scmp.eq.s32.totalorder %s21, 1
      %p60 = scmp.ne.s32.totalorder %s55, %s57
      %p61 = scmp.eq.s32.totalorder %s21, 0
      %p62 = por %p60, %p61
      %p63 = scmp.ne.s32.totalorder %s55, %s57
      %p64 = scmp.eq.s32.totalorder %s26, 1
      %p65 = por %p63, %p64
      %p66 = scmp.ne.s32.totalorder %s57, %s58
      %p67 = scmp.eq.s32.totalorder %s26, 0
      %p68 = por %p66, %p67
      %p69 = scmp.ne.s32.totalorder %s57, %s58
      %p70 = scmp.eq.s32.totalorder %s27, 1
      %p71 = por %p69, %p70
      %p73 = scmp.ne.s32.totalorder %s58, %s72
      %p74 = scmp.eq.s32.totalorder %s27, 0
      %p75 = por %p73, %p74
      %s77 = sadd.s32 %s76, 1
      %p80 = scmp.eq.s32.totalorder %s21, 1
      %p81 = scmp.ne.s32.totalorder %s76, %s78
      %p82 = scmp.eq.s32.totalorder %s21, 0
      %p83 = por %p81, %p82
      %p84 = scmp.ne.s32.totalorder %s76, %s78
      %p85 = scmp.eq.s32.totalorder %s26, 1
      %p86 = por %p84, %p85
      %p87 = scmp.ne.s32.totalorder %s78, %s79
      %p88 = scmp.eq.s32.totalorder %s26, 0
      %p89 = por %p87, %p88
      %p90 = scmp.ne.s32.totalorder %s78, %s79
      %p91 = scmp.eq.s32.totalorder %s27, 1
      %p92 = por %p90, %p91
      %p94 = scmp.ne.s32.totalorder %s79, %s93
      %p95 = scmp.eq.s32.totalorder %s27, 0
      %p96 = por %p94, %p95
      %s98 = sadd.s32 %s97, 1
      %p101 = scmp.eq.s32.totalorder %s21, 1
      %p102 = scmp.ne.s32.totalorder %s97, %s99
      %p103 = scmp.eq.s32.totalorder %s21, 0
      %p104 = por %p102, %p103
      %p105 = scmp.ne.s32.totalorder %s97, %s99
      %p106 = scmp.eq.s32.totalorder %s26, 1
      %p107 = por %p105, %p106
      %p108 = scmp.ne.s32.totalorder %s99, %s100
      %p109 = scmp.eq.s32.totalorder %s26, 0
      %p110 = por %p108, %p109
      %p111 = scmp.ne.s32.totalorder %s99, %s100
      %p112 = scmp.eq.s32.totalorder %s27, 1
      %p113 = por %p111, %p112
      %p115 = scmp.ne.s32.totalorder %s100, %s114
      %p116 = scmp.eq.s32.totalorder %s27, 0
      %p117 = por %p115, %p116
      %s119 = sadd.s32 %s118, 1
      %p122 = scmp.eq.s32.totalorder %s21, 1
      %p123 = scmp.ne.s32.totalorder %s118, %s120
      %p124 = scmp.eq.s32.totalorder %s21, 0
      %p125 = por %p123, %p124
      %p126 = scmp.ne.s32.totalorder %s118, %s120
      %p127 = scmp.eq.s32.totalorder %s26, 1
      %p128 = por %p126, %p127
      %p129 = scmp.ne.s32.totalorder %s120, %s121
      %p130 = scmp.eq.s32.totalorder %s26, 0
      %p131 = por %p129, %p130
      %p132 = scmp.ne.s32.totalorder %s120, %s121
      %p133 = scmp.eq.s32.totalorder %s27, 1
      %p134 = por %p132, %p133
      %p136 = scmp.ne.s32.totalorder %s121, %s135
      %p137 = scmp.eq.s32.totalorder %s27, 0
      %p138 = por %p136, %p137
      %s140 = sadd.s32 %s139, 1
      %p143 = scmp.eq.s32.totalorder %s21, 1
      %p144 = scmp.ne.s32.totalorder %s139, %s141
      %p145 = scmp.eq.s32.totalorder %s21, 0
      %p146 = por %p144, %p145
      %p147 = scmp.ne.s32.totalorder %s139, %s141
      %p148 = scmp.eq.s32.totalorder %s26, 1
      %p149 = por %p147, %p148
      %p150 = scmp.ne.s32.totalorder %s141, %s142
      %p151 = scmp.eq.s32.totalorder %s26, 0
      %p152 = por %p150, %p151
      %p153 = scmp.ne.s32.totalorder %s141, %s142
      %p154 = scmp.eq.s32.totalorder %s27, 1
      %p155 = por %p153, %p154
      %p157 = scmp.ne.s32.totalorder %s142, %s156
      %p158 = scmp.eq.s32.totalorder %s27, 0
      %p159 = por %p157, %p158
      %s161 = sadd.s32 %s160, 1
      %p164 = scmp.eq.s32.totalorder %s21, 1
      %p165 = scmp.ne.s32.totalorder %s160, %s162
      %p166 = scmp.eq.s32.totalorder %s21, 0
      %p167 = por %p165, %p166
      %p168 = scmp.ne.s32.totalorder %s160, %s162
      %p169 = scmp.eq.s32.totalorder %s26, 1
      %p170 = por %p168, %p169
      %p171 = scmp.ne.s32.totalorder %s162, %s163
      %p172 = scmp.eq.s32.totalorder %s26, 0
      %p173 = por %p171, %p172
      %p174 = scmp.ne.s32.totalorder %s162, %s163
      %p175 = scmp.eq.s32.totalorder %s27, 1
      %p176 = por %p174, %p175
      %p178 = scmp.ne.s32.totalorder %s163, %s177
      %p179 = scmp.eq.s32.totalorder %s27, 0
      %p180 = por %p178, %p179
      %s181 = ssub.s32 %s21, %s28
      %p182 = scmp.eq.s32.totalorder %s181, 0
      %s184 = sadd.s32 %s183, 1
      %s185 = scalar_select %p182, %s183, %s184
      %p188 = pneg %p182
      %p189 = scmp.eq.s32.totalorder %s21, 1
      %p190 = por %p188, %p189
      %p191 = scmp.ne.s32.totalorder %s183, %s186
      %p192 = scmp.eq.s32.totalorder %s21, 0
      %p193 = por %p191, %p192
      %p194 = scmp.ne.s32.totalorder %s183, %s186
      %p195 = scmp.eq.s32.totalorder %s26, 1
      %p196 = por %p194, %p195
      %p197 = scmp.ne.s32.totalorder %s186, %s187
      %p198 = scmp.eq.s32.totalorder %s26, 0
      %p199 = por %p197, %p198
      %p200 = scmp.ne.s32.totalorder %s186, %s187
      %p201 = scmp.eq.s32.totalorder %s27, 1
      %p202 = por %p200, %p201
      %p204 = scmp.ne.s32.totalorder %s187, %s203
      %p205 = scmp.eq.s32.totalorder %s27, 0
      %p206 = por %p204, %p205
      %p207 = scmp.le.s32.totalorder 1, %s21
      %p208 = scmp.lt.s32.totalorder %s21, 3
      %p209 = pnand %p207, %p208
      %p210 = pneg %p209
      // Predicated region
      $region9: #{tpu_custom_call.1} parent=5 // pred_check
        _
      $region10: #{tpu_custom_call.1} parent=5 // pred_check_branch
        %212 = sbr.rel (%p209) target = $region12
      $region11: #{tpu_custom_call.1} parent=5 // pred_region
        %s213 = ssub.s32 %s21, 1
        // Predicated region
        $region13: #{tpu_custom_call.1} parent=11 // pred_check
          %p214 = pneg %p68
        $region14: #{tpu_custom_call.1} parent=11 // pred_check_branch
          %216 = sbr.rel (%p214) target = $region16
        $region15: #{tpu_custom_call.1} parent=11 // pred_region
          %218 = vsyncadd [#allocation6], 0
          %s219 = sshll.u32 %s1, 4
          %s220 = int_to_ptr.hbm [resolvable:$true] %s219
          %s221 = sshll.u32 [#allocation5], 4
          %s222 = int_to_ptr.vmem [resolvable:$true] %s221
          %227 = dma.hbm_to_vmem [thread:$0]  %s220, 2048, %s222, [#allocation6], 128, 128, 8
        $region16: #{tpu_custom_call.1} parent=11 // pred_fallthru
          _
        // Predicated region
        $region17: #{tpu_custom_call.1} parent=11 // pred_check
          %p228 = pneg %p89
        $region18: #{tpu_custom_call.1} parent=11 // pred_check_branch
          %230 = sbr.rel (%p228) target = $region20
        $region19: #{tpu_custom_call.1} parent=11 // pred_region
          _
        $region20: #{tpu_custom_call.1} parent=11 // pred_fallthru
          _
        // Predicated region
        $region21: #{tpu_custom_call.1} parent=11 // pred_check
          %p231 = pneg %p110
        $region22: #{tpu_custom_call.1} parent=11 // pred_check_branch
          %233 = sbr.rel (%p231) target = $region24
        $region23: #{tpu_custom_call.1} parent=11 // pred_region
          %235 = vsyncadd [#allocation6], 0
          %s236 = sshll.u32 %s3, 4
          %s237 = int_to_ptr.hbm [resolvable:$true] %s236
          %s238 = sshll.u32 [#allocation7], 4
          %s239 = int_to_ptr.vmem [resolvable:$true] %s238
          %244 = dma.hbm_to_vmem [thread:$0]  %s237, 2048, %s239, [#allocation6], 128, 128, 8
        $region24: #{tpu_custom_call.1} parent=11 // pred_fallthru
          _
        // Predicated region
        $region25: #{tpu_custom_call.1} parent=11 // pred_check
          %p245 = pneg %p131
        $region26: #{tpu_custom_call.1} parent=11 // pred_check_branch
          %247 = sbr.rel (%p245) target = $region28
        $region27: #{tpu_custom_call.1} parent=11 // pred_region
          _
        $region28: #{tpu_custom_call.1} parent=11 // pred_fallthru
          _
        // Predicated region
        $region29: #{tpu_custom_call.1} parent=11 // pred_check
          %p248 = pneg %p152
        $region30: #{tpu_custom_call.1} parent=11 // pred_check_branch
          %250 = sbr.rel (%p248) target = $region32
        $region31: #{tpu_custom_call.1} parent=11 // pred_region
          %252 = vsyncadd [#allocation9], 0
          %s253 = sshll.u32 %s5, 4
          %s254 = int_to_ptr.hbm [resolvable:$true] %s253
          %s255 = sshll.u32 [#allocation8], 4
          %s256 = int_to_ptr.vmem [resolvable:$true] %s255
          %261 = dma.hbm_to_vmem [thread:$0]  %s254, 2048, %s256, [#allocation9], 128, 128, 8
        $region32: #{tpu_custom_call.1} parent=11 // pred_fallthru
          _
        // Predicated region
        $region33: #{tpu_custom_call.1} parent=11 // pred_check
          %p262 = pneg %p173
        $region34: #{tpu_custom_call.1} parent=11 // pred_check_branch
          %264 = sbr.rel (%p262) target = $region36
        $region35: #{tpu_custom_call.1} parent=11 // pred_region
          _
        $region36: #{tpu_custom_call.1} parent=11 // pred_fallthru
          _
      $region12: #{tpu_custom_call.1} parent=5 // pred_fallthru
        _
      %p265 = scmp.lt.s32.totalorder %s21, 2
      // Predicated region
      $region37: #{tpu_custom_call.1} parent=5 // pred_check
        %p266 = pneg %p265
      $region38: #{tpu_custom_call.1} parent=5 // pred_check_branch
        %268 = sbr.rel (%p266) target = $region40
      $region39: #{tpu_custom_call.1} parent=5 // pred_region
        // Predicated region
        $region41: #{tpu_custom_call.1} parent=39 // pred_check
          %p269 = pneg %p41
        $region42: #{tpu_custom_call.1} parent=39 // pred_check_branch
          %271 = sbr.rel (%p269) target = $region44
        $region43: #{tpu_custom_call.1} parent=39 // pred_region
          %s272 = sand.u32 %s31, 1
          %s273 = scalar_lea.sflag [#allocation3], %s272
          %s274 = sand.u32 %s31, 1
          %s275 = smul.addr %s274, 104
          %s276 = scalar_lea.vmem [#allocation2], %s275
          %s277 = smul.u32 13, %s21
          %s278 = ssub.s32 25, %s277
          %p279 = scmp.lt.s32.totalorder %s278, 13
          %s280 = scalar_select %p279, %s278, 13
          %s281 = smul.u32 8, %s280
          %s282 = ssub.s32 104, %s281
          %s283 = sshll.u32 %s282, 4
          %284 = vsyncadd %s273, %s283
          %p285 = scmp.ne.s32.totalorder 0, %s281
          %s286 = smul.addr %s277, 8
          %s287 = scalar_lea.hbm %s0, %s286
          %s288 = smul.u32 8, %s280
          %s289 = sshll.u32 %s287, 4
          %s290 = int_to_ptr.hbm [resolvable:$true] %s289
          %s291 = sshll.u32 %s276, 4
          %s292 = int_to_ptr.vmem [resolvable:$true] %s291
          %s293 = sshll.u32 %s288, 4
          %297 = dma.hbm_to_vmem [thread:$0]  (%p285), %s290, %s293, %s292, %s273, 128, 128, 8
        $region44: #{tpu_custom_call.1} parent=39 // pred_fallthru
          _
      $region40: #{tpu_custom_call.1} parent=5 // pred_fallthru
        _
      %p298 = scmp.le.s32.totalorder 1, %s21
      %p299 = scmp.lt.s32.totalorder %s21, 3
      %p300 = pnand %p298, %p299
      %p301 = pneg %p300
      // Predicated region
      $region45: #{tpu_custom_call.1} parent=5 // pred_check
        _
      $region46: #{tpu_custom_call.1} parent=5 // pred_check_branch
        %303 = sbr.rel (%p300) target = $region48
      $region47: #{tpu_custom_call.1} parent=5 // pred_region
        %s304 = ssub.s32 %s21, 1
        %s305 = sand.u32 %s34, 1
        %s306 = scalar_lea.sflag [#allocation3], %s305
        %s307 = sand.u32 %s34, 1
        %s308 = smul.addr %s307, 104
        %s309 = scalar_lea.vmem [#allocation2], %s308
        // Predicated region
        $region49: #{tpu_custom_call.1} parent=47 // pred_check
          %p310 = pneg %p47
        $region50: #{tpu_custom_call.1} parent=47 // pred_check_branch
          %312 = sbr.rel (%p310) target = $region52
        $region51: #{tpu_custom_call.1} parent=47 // pred_region
          %314 = dma.done %s306, 1664
        $region52: #{tpu_custom_call.1} parent=47 // pred_fallthru
          _
        // Predicated region
        $region53: #{tpu_custom_call.1} parent=47 // pred_check
          %p315 = pneg %p68
        $region54: #{tpu_custom_call.1} parent=47 // pred_check_branch
          %317 = sbr.rel (%p315) target = $region56
        $region55: #{tpu_custom_call.1} parent=47 // pred_region
          %319 = dma.done [#allocation6], 2048
        $region56: #{tpu_custom_call.1} parent=47 // pred_fallthru
          _
        // Predicated region
        $region57: #{tpu_custom_call.1} parent=47 // pred_check
          %p320 = pneg %p110
        $region58: #{tpu_custom_call.1} parent=47 // pred_check_branch
          %322 = sbr.rel (%p320) target = $region60
        $region59: #{tpu_custom_call.1} parent=47 // pred_region
          %324 = dma.done [#allocation6], 2048
        $region60: #{tpu_custom_call.1} parent=47 // pred_fallthru
          _
        // Predicated region
        $region61: #{tpu_custom_call.1} parent=47 // pred_check
          %p325 = pneg %p152
        $region62: #{tpu_custom_call.1} parent=47 // pred_check_branch
          %327 = sbr.rel (%p325) target = $region64
        $region63: #{tpu_custom_call.1} parent=47 // pred_region
          %329 = dma.done [#allocation9], 2048
        $region64: #{tpu_custom_call.1} parent=47 // pred_fallthru
          _
        %s330 = sand.u32 %s34, 1
        %s331 = scalar_lea.sflag [#allocation3], %s330
        %s332 = sand.u32 %s34, 1
        %s333 = smul.addr %s332, 104
        %s334 = scalar_lea.vmem [#allocation2], %s333
        %p335 = pneg %p47
        %p336 = pneg %p44
        %p337 = pneg %p68
        %p338 = pneg %p65
        %p339 = pneg %p89
        %p340 = pneg %p86
        %p341 = pneg %p110
        %p342 = pneg %p107
        %p343 = pneg %p131
        %p344 = pneg %p128
        %p345 = pneg %p152
        %p346 = pneg %p149
        %p347 = pneg %p173
        %p348 = pneg %p170
        %p349 = pneg %p199
        %p350 = pneg %p196
        %s351 = sand.u32 %s186, 1
        %s352 = scalar_lea.sflag [#allocation4], %s351
        %s353 = sand.u32 %s186, 1
        %s354 = smul.addr %s353, 104
        %s355 = scalar_lea.vmem [#allocation10], %s354
        %s356 = smul.u32 13, %s26
        %s357 = ssub.s32 25, %s356
        %p358 = scmp.lt.s32.totalorder %s357, 13
        %s359 = scalar_select %p358, %s357, 13
        %s360 = smul.u32 8, %s359
        %s361 = smul.u32 13, %s26
        %s362 = ssub.s32 25, %s361
        %p363 = scmp.lt.s32.totalorder %s362, 13
        %s364 = scalar_select %p363, %s362, 13
        %s365 = smul.u32 8, %s364
        %v366 = vld [vmem:[%s309] sm:$0xff]
        %v367 = vld [vmem:[%s309 + $0x8] sm:$0xff]
        %v368 = vld [vmem:[%s309 + $0x10] sm:$0xff]
        %v369 = vld [vmem:[%s309 + $0x18] sm:$0xff]
        %v370 = vld [vmem:[%s309 + $0x20] sm:$0xff]
        %v371 = vld [vmem:[%s309 + $0x28] sm:$0xff]
        %v372 = vld [vmem:[%s309 + $0x30] sm:$0xff]
        %v373 = vld [vmem:[%s309 + $0x38] sm:$0xff]
        %v374 = vld [vmem:[%s309 + $0x40] sm:$0xff]
        %v375 = vld [vmem:[%s309 + $0x48] sm:$0xff]
        %v376 = vld [vmem:[%s309 + $0x50] sm:$0xff]
        %v377 = vld [vmem:[%s309 + $0x58] sm:$0xff]
        %v378 = vld [vmem:[%s309 + $0x60] sm:$0xff]
        %v379 = vld [vmem:[#allocation5] sm:$0xff]
        %v380 = vld [vmem:[#allocation5 + $0x8] sm:$0xff]
        %v381 = vld [vmem:[#allocation5 + $0x10] sm:$0xff]
        %v382 = vld [vmem:[#allocation5 + $0x18] sm:$0xff]
        %v383 = vld [vmem:[#allocation5 + $0x20] sm:$0xff]
        %v384 = vld [vmem:[#allocation5 + $0x28] sm:$0xff]
        %v385 = vld [vmem:[#allocation5 + $0x30] sm:$0xff]
        %v386 = vld [vmem:[#allocation5 + $0x38] sm:$0xff]
        %v387 = vld [vmem:[#allocation5 + $0x40] sm:$0xff]
        %v388 = vld [vmem:[#allocation5 + $0x48] sm:$0xff]
        %v389 = vld [vmem:[#allocation5 + $0x50] sm:$0xff]
        %v390 = vld [vmem:[#allocation5 + $0x58] sm:$0xff]
        %v391 = vld [vmem:[#allocation5 + $0x60] sm:$0xff]
        %v392 = vld [vmem:[#allocation5 + $0x68] sm:$0xff]
        %v393 = vld [vmem:[#allocation5 + $0x70] sm:$0xff]
        %v394 = vld [vmem:[#allocation5 + $0x78] sm:$0xff]
        %v395 = vld [vmem:[%s2] sm:$0x1]
        %v397 = vperm.slane %v395, 0
        %399 = vmatpush.msra.mxu0 %v394
        %400 = vmatpush.msra.mxu0 %v393
        %401 = vmatpush.msra.mxu0 %v392
        %402 = vmatpush.msra.mxu0 %v391
        %403 = vmatpush.msra.mxu0 %v390
        %404 = vmatpush.msra.mxu0 %v389
        %405 = vmatpush.msra.mxu0 %v388
        %406 = vmatpush.msra.mxu0 %v387
        %407 = vmatpush.msra.mxu0 %v386
        %408 = vmatpush.msra.mxu0 %v385
        %409 = vmatpush.msra.mxu0 %v384
        %410 = vmatpush.msra.mxu0 %v383
        %411 = vmatpush.msra.mxu0 %v382
        %412 = vmatpush.msra.mxu0 %v381
        %413 = vmatpush.msra.mxu0 %v380
        %414 = vmatpush.msra.mxu0 %v379
        %415 = vmatmul.f32.gmra.mxu0 %v366
        %v416 = vpop.f32.mrf.mxu0
        %v417 = vadd.f32 %v397, %v416
        %418 = vmatmul.f32.gmra.mxu0 %v367
        %v419 = vpop.f32.mrf.mxu0
        %v420 = vadd.f32 %v397, %v419
        %421 = vmatmul.f32.gmra.mxu0 %v368
        %v422 = vpop.f32.mrf.mxu0
        %v423 = vadd.f32 %v397, %v422
        %424 = vmatmul.f32.gmra.mxu0 %v369
        %v425 = vpop.f32.mrf.mxu0
        %v426 = vadd.f32 %v397, %v425
        %427 = vmatmul.f32.gmra.mxu0 %v370
        %v428 = vpop.f32.mrf.mxu0
        %v429 = vadd.f32 %v397, %v428
        %430 = vmatmul.f32.gmra.mxu0 %v371
        %v431 = vpop.f32.mrf.mxu0
        %v432 = vadd.f32 %v397, %v431
        %433 = vmatmul.f32.gmra.mxu0 %v372
        %v434 = vpop.f32.mrf.mxu0
        %v435 = vadd.f32 %v397, %v434
        %436 = vmatmul.f32.gmra.mxu0 %v373
        %v437 = vpop.f32.mrf.mxu0
        %v438 = vadd.f32 %v397, %v437
        %439 = vmatmul.f32.gmra.mxu0 %v374
        %v440 = vpop.f32.mrf.mxu0
        %v441 = vadd.f32 %v397, %v440
        %442 = vmatmul.f32.gmra.mxu0 %v375
        %v443 = vpop.f32.mrf.mxu0
        %v444 = vadd.f32 %v397, %v443
        %445 = vmatmul.f32.gmra.mxu0 %v376
        %v446 = vpop.f32.mrf.mxu0
        %v447 = vadd.f32 %v397, %v446
        %448 = vmatmul.f32.gmra.mxu0 %v377
        %v449 = vpop.f32.mrf.mxu0
        %v450 = vadd.f32 %v397, %v449
        %451 = vmatmul.f32.gmra.mxu0 %v378
        %v452 = vpop.f32.mrf.mxu0
        %v453 = vadd.f32 %v397, %v452
        %454 = vdwg.mxu0
        %v455 = vmax.f32 %v417, 0.0
        %v456 = vmax.f32 %v420, 0.0
        %v457 = vmax.f32 %v423, 0.0
        %v458 = vmax.f32 %v426, 0.0
        %v459 = vmax.f32 %v429, 0.0
        %v460 = vmax.f32 %v432, 0.0
        %v461 = vmax.f32 %v435, 0.0
        %v462 = vmax.f32 %v438, 0.0
        %v463 = vmax.f32 %v441, 0.0
        %v464 = vmax.f32 %v444, 0.0
        %v465 = vmax.f32 %v447, 0.0
        %v466 = vmax.f32 %v450, 0.0
        %v467 = vmax.f32 %v453, 0.0
        %v468 = vld [vmem:[#allocation7] sm:$0xff]
        %v469 = vld [vmem:[#allocation7 + $0x8] sm:$0xff]
        %v470 = vld [vmem:[#allocation7 + $0x10] sm:$0xff]
        %v471 = vld [vmem:[#allocation7 + $0x18] sm:$0xff]
        %v472 = vld [vmem:[#allocation7 + $0x20] sm:$0xff]
        %v473 = vld [vmem:[#allocation7 + $0x28] sm:$0xff]
        %v474 = vld [vmem:[#allocation7 + $0x30] sm:$0xff]
        %v475 = vld [vmem:[#allocation7 + $0x38] sm:$0xff]
        %v476 = vld [vmem:[#allocation7 + $0x40] sm:$0xff]
        %v477 = vld [vmem:[#allocation7 + $0x48] sm:$0xff]
        %v478 = vld [vmem:[#allocation7 + $0x50] sm:$0xff]
        %v479 = vld [vmem:[#allocation7 + $0x58] sm:$0xff]
        %v480 = vld [vmem:[#allocation7 + $0x60] sm:$0xff]
        %v481 = vld [vmem:[#allocation7 + $0x68] sm:$0xff]
        %v482 = vld [vmem:[#allocation7 + $0x70] sm:$0xff]
        %v483 = vld [vmem:[#allocation7 + $0x78] sm:$0xff]
        %v484 = vld [vmem:[%s4] sm:$0x1]
        %v486 = vperm.slane %v484, 0
        %488 = vmatpush.msra.mxu0 %v483
        %489 = vmatpush.msra.mxu0 %v482
        %490 = vmatpush.msra.mxu0 %v481
        %491 = vmatpush.msra.mxu0 %v480
        %492 = vmatpush.msra.mxu0 %v479
        %493 = vmatpush.msra.mxu0 %v478
        %494 = vmatpush.msra.mxu0 %v477
        %495 = vmatpush.msra.mxu0 %v476
        %496 = vmatpush.msra.mxu0 %v475
        %497 = vmatpush.msra.mxu0 %v474
        %498 = vmatpush.msra.mxu0 %v473
        %499 = vmatpush.msra.mxu0 %v472
        %500 = vmatpush.msra.mxu0 %v471
        %501 = vmatpush.msra.mxu0 %v470
        %502 = vmatpush.msra.mxu0 %v469
        %503 = vmatpush.msra.mxu0 %v468
        %504 = vmatmul.f32.gmra.mxu0 %v455
        %v505 = vpop.f32.mrf.mxu0
        %v506 = vadd.f32 %v486, %v505
        %507 = vmatmul.f32.gmra.mxu0 %v456
        %v508 = vpop.f32.mrf.mxu0
        %v509 = vadd.f32 %v486, %v508
        %510 = vmatmul.f32.gmra.mxu0 %v457
        %v511 = vpop.f32.mrf.mxu0
        %v512 = vadd.f32 %v486, %v511
        %513 = vmatmul.f32.gmra.mxu0 %v458
        %v514 = vpop.f32.mrf.mxu0
        %v515 = vadd.f32 %v486, %v514
        %516 = vmatmul.f32.gmra.mxu0 %v459
        %v517 = vpop.f32.mrf.mxu0
        %v518 = vadd.f32 %v486, %v517
        %519 = vmatmul.f32.gmra.mxu0 %v460
        %v520 = vpop.f32.mrf.mxu0
        %v521 = vadd.f32 %v486, %v520
        %522 = vmatmul.f32.gmra.mxu0 %v461
        %v523 = vpop.f32.mrf.mxu0
        %v524 = vadd.f32 %v486, %v523
        %525 = vmatmul.f32.gmra.mxu0 %v462
        %v526 = vpop.f32.mrf.mxu0
        %v527 = vadd.f32 %v486, %v526
        %528 = vmatmul.f32.gmra.mxu0 %v463
        %v529 = vpop.f32.mrf.mxu0
        %v530 = vadd.f32 %v486, %v529
        %531 = vmatmul.f32.gmra.mxu0 %v464
        %v532 = vpop.f32.mrf.mxu0
        %v533 = vadd.f32 %v486, %v532
        %534 = vmatmul.f32.gmra.mxu0 %v465
        %v535 = vpop.f32.mrf.mxu0
        %v536 = vadd.f32 %v486, %v535
        %537 = vmatmul.f32.gmra.mxu0 %v466
        %v538 = vpop.f32.mrf.mxu0
        %v539 = vadd.f32 %v486, %v538
        %540 = vmatmul.f32.gmra.mxu0 %v467
        %v541 = vpop.f32.mrf.mxu0
        %v542 = vadd.f32 %v486, %v541
        %543 = vdwg.mxu0
        %v544 = vmax.f32 %v506, 0.0
        %v545 = vmax.f32 %v509, 0.0
        %v546 = vmax.f32 %v512, 0.0
        %v547 = vmax.f32 %v515, 0.0
        %v548 = vmax.f32 %v518, 0.0
        %v549 = vmax.f32 %v521, 0.0
        %v550 = vmax.f32 %v524, 0.0
        %v551 = vmax.f32 %v527, 0.0
        %v552 = vmax.f32 %v530, 0.0
        %v553 = vmax.f32 %v533, 0.0
        %v554 = vmax.f32 %v536, 0.0
        %v555 = vmax.f32 %v539, 0.0
        %v556 = vmax.f32 %v542, 0.0
        %v557 = vld [vmem:[#allocation8] sm:$0xff]
        %v558 = vld [vmem:[#allocation8 + $0x8] sm:$0xff]
        %v559 = vld [vmem:[#allocation8 + $0x10] sm:$0xff]
        %v560 = vld [vmem:[#allocation8 + $0x18] sm:$0xff]
        %v561 = vld [vmem:[#allocation8 + $0x20] sm:$0xff]
        %v562 = vld [vmem:[#allocation8 + $0x28] sm:$0xff]
        %v563 = vld [vmem:[#allocation8 + $0x30] sm:$0xff]
        %v564 = vld [vmem:[#allocation8 + $0x38] sm:$0xff]
        %v565 = vld [vmem:[#allocation8 + $0x40] sm:$0xff]
        %v566 = vld [vmem:[#allocation8 + $0x48] sm:$0xff]
        %v567 = vld [vmem:[#allocation8 + $0x50] sm:$0xff]
        %v568 = vld [vmem:[#allocation8 + $0x58] sm:$0xff]
        %v569 = vld [vmem:[#allocation8 + $0x60] sm:$0xff]
        %v570 = vld [vmem:[#allocation8 + $0x68] sm:$0xff]
        %v571 = vld [vmem:[#allocation8 + $0x70] sm:$0xff]
        %v572 = vld [vmem:[#allocation8 + $0x78] sm:$0xff]
        %v573 = vld [vmem:[%s6] sm:$0x1]
        %v575 = vperm.slane %v573, 0
        %577 = vmatpush.msra.mxu0 %v572
        %578 = vmatpush.msra.mxu0 %v571
        %579 = vmatpush.msra.mxu0 %v570
        %580 = vmatpush.msra.mxu0 %v569
        %581 = vmatpush.msra.mxu0 %v568
        %582 = vmatpush.msra.mxu0 %v567
        %583 = vmatpush.msra.mxu0 %v566
        %584 = vmatpush.msra.mxu0 %v565
        %585 = vmatpush.msra.mxu0 %v564
        %586 = vmatpush.msra.mxu0 %v563
        %587 = vmatpush.msra.mxu0 %v562
        %588 = vmatpush.msra.mxu0 %v561
        %589 = vmatpush.msra.mxu0 %v560
        %590 = vmatpush.msra.mxu0 %v559
        %591 = vmatpush.msra.mxu0 %v558
        %592 = vmatpush.msra.mxu0 %v557
        %593 = vmatmul.f32.gmra.mxu0 %v544
        %v594 = vpop.f32.mrf.mxu0
        %v595 = vadd.f32 %v575, %v594
        %596 = vmatmul.f32.gmra.mxu0 %v545
        %v597 = vpop.f32.mrf.mxu0
        %v598 = vadd.f32 %v575, %v597
        %599 = vmatmul.f32.gmra.mxu0 %v546
        %v600 = vpop.f32.mrf.mxu0
        %v601 = vadd.f32 %v575, %v600
        %602 = vmatmul.f32.gmra.mxu0 %v547
        %v603 = vpop.f32.mrf.mxu0
        %v604 = vadd.f32 %v575, %v603
        %605 = vmatmul.f32.gmra.mxu0 %v548
        %v606 = vpop.f32.mrf.mxu0
        %v607 = vadd.f32 %v575, %v606
        %608 = vmatmul.f32.gmra.mxu0 %v549
        %v609 = vpop.f32.mrf.mxu0
        %v610 = vadd.f32 %v575, %v609
        %611 = vmatmul.f32.gmra.mxu0 %v550
        %v612 = vpop.f32.mrf.mxu0
        %v613 = vadd.f32 %v575, %v612
        %614 = vmatmul.f32.gmra.mxu0 %v551
        %v615 = vpop.f32.mrf.mxu0
        %v616 = vadd.f32 %v575, %v615
        %617 = vmatmul.f32.gmra.mxu0 %v552
        %v618 = vpop.f32.mrf.mxu0
        %v619 = vadd.f32 %v575, %v618
        %620 = vmatmul.f32.gmra.mxu0 %v553
        %v621 = vpop.f32.mrf.mxu0
        %v622 = vadd.f32 %v575, %v621
        %623 = vmatmul.f32.gmra.mxu0 %v554
        %v624 = vpop.f32.mrf.mxu0
        %v625 = vadd.f32 %v575, %v624
        %626 = vmatmul.f32.gmra.mxu0 %v555
        %v627 = vpop.f32.mrf.mxu0
        %v628 = vadd.f32 %v575, %v627
        %629 = vmatmul.f32.gmra.mxu0 %v556
        %v630 = vpop.f32.mrf.mxu0
        %v631 = vadd.f32 %v575, %v630
        %632 = vdwg.mxu0
        %633 = vst [vmem:[%s355] sm:$0xff] %v595
        %634 = vst [vmem:[%s355 + $0x8] sm:$0xff] %v598
        %635 = vst [vmem:[%s355 + $0x10] sm:$0xff] %v601
        %636 = vst [vmem:[%s355 + $0x18] sm:$0xff] %v604
        %637 = vst [vmem:[%s355 + $0x20] sm:$0xff] %v607
        %638 = vst [vmem:[%s355 + $0x28] sm:$0xff] %v610
        %639 = vst [vmem:[%s355 + $0x30] sm:$0xff] %v613
        %640 = vst [vmem:[%s355 + $0x38] sm:$0xff] %v616
        %641 = vst [vmem:[%s355 + $0x40] sm:$0xff] %v619
        %642 = vst [vmem:[%s355 + $0x48] sm:$0xff] %v622
        %643 = vst [vmem:[%s355 + $0x50] sm:$0xff] %v625
        %644 = vst [vmem:[%s355 + $0x58] sm:$0xff] %v628
        %645 = vst [vmem:[%s355 + $0x60] sm:$0xff] %v631
        %s646 = sand.u32 %s186, 1
        %s647 = scalar_lea.sflag [#allocation4], %s646
        %s648 = sand.u32 %s186, 1
        %s649 = smul.addr %s648, 104
        %s650 = scalar_lea.vmem [#allocation10], %s649
        // Predicated region
        $region65: #{tpu_custom_call.1} parent=47 // pred_check
          %p651 = pneg %p196
        $region66: #{tpu_custom_call.1} parent=47 // pred_check_branch
          %653 = sbr.rel (%p651) target = $region68
        $region67: #{tpu_custom_call.1} parent=47 // pred_region
          %s654 = smul.u32 13, %s26
          %s655 = ssub.s32 25, %s654
          %p656 = scmp.lt.s32.totalorder %s655, 13
          %s657 = scalar_select %p656, %s655, 13
          %s658 = smul.u32 8, %s657
          %s659 = ssub.s32 104, %s658
          %s660 = sshll.u32 %s659, 4
          %661 = vsyncadd %s647, %s660
          %p662 = scmp.ne.s32.totalorder 0, %s658
          %s663 = smul.addr %s654, 8
          %s664 = scalar_lea.hbm %s7, %s663
          %s665 = smul.u32 8, %s657
          %s666 = sshll.u32 %s650, 4
          %s667 = int_to_ptr.vmem [resolvable:$true] %s666
          %s668 = sshll.u32 %s664, 4
          %s669 = int_to_ptr.hbm [resolvable:$true] %s668
          %s670 = sshll.u32 %s665, 4
          %674 = dma.vmem_to_hbm [thread:$0]  (%p662), %s667, %s670, %s669, %s647, 128, 128, 8
        $region68: #{tpu_custom_call.1} parent=47 // pred_fallthru
          _
      $region48: #{tpu_custom_call.1} parent=5 // pred_fallthru
        _
      %p675 = scmp.le.s32.totalorder 2, %s21
      // Predicated region
      $region69: #{tpu_custom_call.1} parent=5 // pred_check
        %p676 = pneg %p675
      $region70: #{tpu_custom_call.1} parent=5 // pred_check_branch
        %678 = sbr.rel (%p676) target = $region72
      $region71: #{tpu_custom_call.1} parent=5 // pred_region
        %s679 = ssub.s32 %s21, 2
        // Predicated region
        $region73: #{tpu_custom_call.1} parent=71 // pred_check
          %p680 = pneg %p202
        $region74: #{tpu_custom_call.1} parent=71 // pred_check_branch
          %682 = sbr.rel (%p680) target = $region76
        $region75: #{tpu_custom_call.1} parent=71 // pred_region
          %s683 = sand.u32 %s187, 1
          %s684 = scalar_lea.sflag [#allocation4], %s683
          %s685 = sand.u32 %s187, 1
          %s686 = smul.addr %s685, 104
          %s687 = scalar_lea.vmem [#allocation10], %s686
          %689 = dma.done %s684, 1664
        $region76: #{tpu_custom_call.1} parent=71 // pred_fallthru
          _
      $region72: #{tpu_custom_call.1} parent=5 // pred_fallthru
        _
    $region6: #{tpu_custom_call.1} parent=1 // loop_footer
      %s25 = sadd.s32 1, %s21
    $region7: #{tpu_custom_call.1} parent=1 // loop_footer_branch
      %20 = sbr.rel target = $region3
    $region8: #{tpu_custom_call.1} parent=1 // loop_exit
      _
    %690 = vsyncpa [#allocation3], 1
    %s691 = scalar_lea.sflag [#allocation3], 1
    %692 = vsyncpa %s691, 1
    %693 = vsyncpa [#allocation6], 1
    %694 = vsyncpa [#allocation9], 1
    %695 = vsyncpa [#allocation4], 1
    %s696 = scalar_lea.sflag [#allocation4], 1
    %697 = vsyncpa %s696, 1

// kernel: tpu_custom_call.1
$region0: #{tpu_custom_call.1}
  #allocation0 [shape = 'u32[]', space=smem, size = 0x4, offset = 0x4, fixed_abs, tag = 'smem constant byte address 0x4 - core index']
  #allocation1 [shape = 'u32[72,128]{1,0:T(1,128)}', space=vmem, size = 0x9000, scoped, tag = 'internal scratch']
  %s0 = inlined_call_operand.hbm [shape: f32[200,128], index: 0, kind: input, shape index: {}]
  %s1 = inlined_call_operand.hbm [shape: f32[128,128], index: 1, kind: input, shape index: {}]
  %s2 = inlined_call_operand.vmem [shape: f32[1,128], index: 2, kind: input, shape index: {}]
  %s3 = inlined_call_operand.hbm [shape: f32[128,128], index: 3, kind: input, shape index: {}]
  %s4 = inlined_call_operand.vmem [shape: f32[1,128], index: 4, kind: input, shape index: {}]
  %s5 = inlined_call_operand.hbm [shape: f32[128,128], index: 5, kind: input, shape index: {}]
  %s6 = inlined_call_operand.vmem [shape: f32[1,128], index: 6, kind: input, shape index: {}]
  %s7 = inlined_call_operand.hbm [shape: f32[200,128], index: 7, kind: output, shape index: {}]
  %s8 = sld [smem:[#allocation0]]
  $region77: #{tpu_custom_call.1} parent=0
    _
  %s10 = ssub.s32 1, %s8
  %s11 = scalar_select 0, %s10, %s8
  $region1: #{tpu_custom_call.1} parent=0
    #allocation2 [shape = 'u8[106496]{0}', space=vmem, size = 0x1a000, scoped, tag = 'input window, operand 0']
    #allocation3 [shape = 's32[2]{0}', space=sflag, size = 0x8, scoped, tag = 'scoped memory for tpu_custom_call.1']
    #allocation4 [shape = 's32[2]{0}', space=sflag, size = 0x8, scoped, tag = 'scoped memory for tpu_custom_call.1']
    #allocation5 [shape = 'u8[65536]{0}', space=vmem, size = 0x10000, scoped, tag = 'input window, operand 1, single buffered']
    #allocation6 [shape = 's32[1]{0}', space=sflag, size = 0x4, scoped, tag = 'scoped memory for tpu_custom_call.1']
    #allocation7 [shape = 'u8[65536]{0}', space=vmem, size = 0x10000, scoped, tag = 'input window, operand 3, single buffered']
    #allocation8 [shape = 'u8[65536]{0}', space=vmem, size = 0x10000, scoped, tag = 'input window, operand 5, single buffered']
    #allocation9 [shape = 's32[1]{0}', space=sflag, size = 0x4, scoped, tag = 'scoped memory for tpu_custom_call.1']
    #allocation10 [shape = 'u8[106496]{0}', space=vmem, size = 0x1a000, scoped, tag = 'output window, operand 0']
    %12 = vsyncpa [#allocation3], 0
    %s13 = scalar_lea.sflag [#allocation3], 1
    %14 = vsyncpa %s13, 0
    %15 = vsyncpa [#allocation6], 0
    %16 = vsyncpa [#allocation9], 0
    %17 = vsyncpa [#allocation4], 0
    %s18 = scalar_lea.sflag [#allocation4], 1
    %19 = vsyncpa %s18, 0
    loop: start=0, step=1, limit=4
    $region2: #{tpu_custom_call.1} parent=1 // loop_pre_header
      _
    $region3: #{tpu_custom_call.1} parent=1 // loop_header
      %s21 = sphi 0, %s25
      %p22 = scmp.ge.s32.totalorder %s21, 4
      %s31 = sphi 0, %s33
      %s34 = sphi 0, %s31
      %s35 = sphi 0, %s34
      %s51 = sphi 0, %s35
      %s55 = sphi 0, %s55
      %s57 = sphi 0, %s55
      %s58 = sphi 0, %s57
      %s72 = sphi 0, %s58
      %s76 = sphi 0, %s76
      %s78 = sphi 0, %s76
      %s79 = sphi 0, %s78
      %s93 = sphi 0, %s79
      %s97 = sphi 0, %s97
      %s99 = sphi 0, %s97
      %s100 = sphi 0, %s99
      %s114 = sphi 0, %s100
      %s118 = sphi 0, %s118
      %s120 = sphi 0, %s118
      %s121 = sphi 0, %s120
      %s135 = sphi 0, %s121
      %s139 = sphi 0, %s139
      %s141 = sphi 0, %s139
      %s142 = sphi 0, %s141
      %s156 = sphi 0, %s142
      %s160 = sphi 0, %s160
      %s162 = sphi 0, %s160
      %s163 = sphi 0, %s162
      %s177 = sphi 0, %s163
      %s183 = sphi 0, %s185
      %s186 = sphi 0, %s183
      %s187 = sphi 0, %s186
      %s203 = sphi 0, %s187
    $region4: #{tpu_custom_call.1} parent=1 // loop_header_branch
      %24 = sbr.rel (%p22) target = $region8
    $region5: #{tpu_custom_call.1} parent=1 // loop_body
      %s26 = ssub.s32 %s21, 1
      %s27 = ssub.s32 %s21, 2
      %s28 = sadd.s32 %s21, 1
      %s29 = ssub.s32 %s21, %s28
      %p30 = scmp.eq.s32.totalorder %s29, 0
      %s32 = sadd.s32 %s31, 1
      %s33 = scalar_select %p30, %s31, %s32
      %p36 = pneg %p30
      %p37 = scmp.eq.s32.totalorder %s21, 1
      %p38 = por %p36, %p37
      %p39 = scmp.ne.s32.totalorder %s31, %s34
      %p40 = scmp.eq.s32.totalorder %s21, 0
      %p41 = por %p39, %p40
      %p42 = scmp.ne.s32.totalorder %s31, %s34
      %p43 = scmp.eq.s32.totalorder %s26, 1
      %p44 = por %p42, %p43
      %p45 = scmp.ne.s32.totalorder %s34, %s35
      %p46 = scmp.eq.s32.totalorder %s26, 0
      %p47 = por %p45, %p46
      %p48 = scmp.ne.s32.totalorder %s34, %s35
      %p49 = scmp.eq.s32.totalorder %s27, 1
      %p50 = por %p48, %p49
      %p52 = scmp.ne.s32.totalorder %s35, %s51
      %p53 = scmp.eq.s32.totalorder %s27, 0
      %p54 = por %p52, %p53
      %s56 = sadd.s32 %s55, 1
      %p59 = scmp.eq.s32.totalorder %s21, 1
      %p60 = scmp.ne.s32.totalorder %s55, %s57
      %p61 = scmp.eq.s32.totalorder %s21, 0
      %p62 = por %p60, %p61
      %p63 = scmp.ne.s32.totalorder %s55, %s57
      %p64 = scmp.eq.s32.totalorder %s26, 1
      %p65 = por %p63, %p64
      %p66 = scmp.ne.s32.totalorder %s57, %s58
      %p67 = scmp.eq.s32.totalorder %s26, 0
      %p68 = por %p66, %p67
      %p69 = scmp.ne.s32.totalorder %s57, %s58
      %p70 = scmp.eq.s32.totalorder %s27, 1
      %p71 = por %p69, %p70
      %p73 = scmp.ne.s32.totalorder %s58, %s72
      %p74 = scmp.eq.s32.totalorder %s27, 0
      %p75 = por %p73, %p74
      %s77 = sadd.s32 %s76, 1
      %p80 = scmp.eq.s32.totalorder %s21, 1
      %p81 = scmp.ne.s32.totalorder %s76, %s78
      %p82 = scmp.eq.s32.totalorder %s21, 0
      %p83 = por %p81, %p82
      %p84 = scmp.ne.s32.totalorder %s76, %s78
      %p85 = scmp.eq.s32.totalorder %s26, 1
      %p86 = por %p84, %p85
      %p87 = scmp.ne.s32.totalorder %s78, %s79
      %p88 = scmp.eq.s32.totalorder %s26, 0
      %p89 = por %p87, %p88
      %p90 = scmp.ne.s32.totalorder %s78, %s79
      %p91 = scmp.eq.s32.totalorder %s27, 1
      %p92 = por %p90, %p91
      %p94 = scmp.ne.s32.totalorder %s79, %s93
      %p95 = scmp.eq.s32.totalorder %s27, 0
      %p96 = por %p94, %p95
      %s98 = sadd.s32 %s97, 1
      %p101 = scmp.eq.s32.totalorder %s21, 1
      %p102 = scmp.ne.s32.totalorder %s97, %s99
      %p103 = scmp.eq.s32.totalorder %s21, 0
      %p104 = por %p102, %p103
      %p105 = scmp.ne.s32.totalorder %s97, %s99
      %p106 = scmp.eq.s32.totalorder %s26, 1
      %p107 = por %p105, %p106
      %p108 = scmp.ne.s32.totalorder %s99, %s100
      %p109 = scmp.eq.s32.totalorder %s26, 0
      %p110 = por %p108, %p109
      %p111 = scmp.ne.s32.totalorder %s99, %s100
      %p112 = scmp.eq.s32.totalorder %s27, 1
      %p113 = por %p111, %p112
      %p115 = scmp.ne.s32.totalorder %s100, %s114
      %p116 = scmp.eq.s32.totalorder %s27, 0
      %p117 = por %p115, %p116
      %s119 = sadd.s32 %s118, 1
      %p122 = scmp.eq.s32.totalorder %s21, 1
      %p123 = scmp.ne.s32.totalorder %s118, %s120
      %p124 = scmp.eq.s32.totalorder %s21, 0
      %p125 = por %p123, %p124
      %p126 = scmp.ne.s32.totalorder %s118, %s120
      %p127 = scmp.eq.s32.totalorder %s26, 1
      %p128 = por %p126, %p127
      %p129 = scmp.ne.s32.totalorder %s120, %s121
      %p130 = scmp.eq.s32.totalorder %s26, 0
      %p131 = por %p129, %p130
      %p132 = scmp.ne.s32.totalorder %s120, %s121
      %p133 = scmp.eq.s32.totalorder %s27, 1
      %p134 = por %p132, %p133
      %p136 = scmp.ne.s32.totalorder %s121, %s135
      %p137 = scmp.eq.s32.totalorder %s27, 0
      %p138 = por %p136, %p137
      %s140 = sadd.s32 %s139, 1
      %p143 = scmp.eq.s32.totalorder %s21, 1
      %p144 = scmp.ne.s32.totalorder %s139, %s141
      %p145 = scmp.eq.s32.totalorder %s21, 0
      %p146 = por %p144, %p145
      %p147 = scmp.ne.s32.totalorder %s139, %s141
      %p148 = scmp.eq.s32.totalorder %s26, 1
      %p149 = por %p147, %p148
      %p150 = scmp.ne.s32.totalorder %s141, %s142
      %p151 = scmp.eq.s32.totalorder %s26, 0
      %p152 = por %p150, %p151
      %p153 = scmp.ne.s32.totalorder %s141, %s142
      %p154 = scmp.eq.s32.totalorder %s27, 1
      %p155 = por %p153, %p154
      %p157 = scmp.ne.s32.totalorder %s142, %s156
      %p158 = scmp.eq.s32.totalorder %s27, 0
      %p159 = por %p157, %p158
      %s161 = sadd.s32 %s160, 1
      %p164 = scmp.eq.s32.totalorder %s21, 1
      %p165 = scmp.ne.s32.totalorder %s160, %s162
      %p166 = scmp.eq.s32.totalorder %s21, 0
      %p167 = por %p165, %p166
      %p168 = scmp.ne.s32.totalorder %s160, %s162
      %p169 = scmp.eq.s32.totalorder %s26, 1
      %p170 = por %p168, %p169
      %p171 = scmp.ne.s32.totalorder %s162, %s163
      %p172 = scmp.eq.s32.totalorder %s26, 0
      %p173 = por %p171, %p172
      %p174 = scmp.ne.s32.totalorder %s162, %s163
      %p175 = scmp.eq.s32.totalorder %s27, 1
      %p176 = por %p174, %p175
      %p178 = scmp.ne.s32.totalorder %s163, %s177
      %p179 = scmp.eq.s32.totalorder %s27, 0
      %p180 = por %p178, %p179
      %s181 = ssub.s32 %s21, %s28
      %p182 = scmp.eq.s32.totalorder %s181, 0
      %s184 = sadd.s32 %s183, 1
      %s185 = scalar_select %p182, %s183, %s184
      %p188 = pneg %p182
      %p189 = scmp.eq.s32.totalorder %s21, 1
      %p190 = por %p188, %p189
      %p191 = scmp.ne.s32.totalorder %s183, %s186
      %p192 = scmp.eq.s32.totalorder %s21, 0
      %p193 = por %p191, %p192
      %p194 = scmp.ne.s32.totalorder %s183, %s186
      %p195 = scmp.eq.s32.totalorder %s26, 1
      %p196 = por %p194, %p195
      %p197 = scmp.ne.s32.totalorder %s186, %s187
      %p198 = scmp.eq.s32.totalorder %s26, 0
      %p199 = por %p197, %p198
      %p200 = scmp.ne.s32.totalorder %s186, %s187
      %p201 = scmp.eq.s32.totalorder %s27, 1
      %p202 = por %p200, %p201
      %p204 = scmp.ne.s32.totalorder %s187, %s203
      %p205 = scmp.eq.s32.totalorder %s27, 0
      %p206 = por %p204, %p205
      %p207 = scmp.le.s32.totalorder 1, %s21
      %p208 = scmp.lt.s32.totalorder %s21, 3
      %p209 = pnand %p207, %p208
      %p210 = pneg %p209
      // Predicated region
      $region9: #{tpu_custom_call.1} parent=5 // pred_check
        _
      $region10: #{tpu_custom_call.1} parent=5 // pred_check_branch
        %212 = sbr.rel (%p209) target = $region12
      $region11: #{tpu_custom_call.1} parent=5 // pred_region
        %s213 = ssub.s32 %s21, 1
        // Predicated region
        $region13: #{tpu_custom_call.1} parent=11 // pred_check
          %p214 = pneg %p68
        $region14: #{tpu_custom_call.1} parent=11 // pred_check_branch
          %216 = sbr.rel (%p214) target = $region16
        $region15: #{tpu_custom_call.1} parent=11 // pred_region
          %218 = vsyncadd [#allocation6], 0
          %s219 = sshll.u32 %s1, 4
          %s220 = int_to_ptr.hbm [resolvable:$true] %s219
          %s221 = sshll.u32 [#allocation5], 4
          %s222 = int_to_ptr.vmem [resolvable:$true] %s221
          %227 = dma.hbm_to_vmem [thread:$0]  %s220, 2048, %s222, [#allocation6], 128, 128, 8
        $region16: #{tpu_custom_call.1} parent=11 // pred_fallthru
          _
        // Predicated region
        $region17: #{tpu_custom_call.1} parent=11 // pred_check
          %p228 = pneg %p89
        $region18: #{tpu_custom_call.1} parent=11 // pred_check_branch
          %230 = sbr.rel (%p228) target = $region20
        $region19: #{tpu_custom_call.1} parent=11 // pred_region
          _
        $region20: #{tpu_custom_call.1} parent=11 // pred_fallthru
          _
        // Predicated region
        $region21: #{tpu_custom_call.1} parent=11 // pred_check
          %p231 = pneg %p110
        $region22: #{tpu_custom_call.1} parent=11 // pred_check_branch
          %233 = sbr.rel (%p231) target = $region24
        $region23: #{tpu_custom_call.1} parent=11 // pred_region
          %235 = vsyncadd [#allocation6], 0
          %s236 = sshll.u32 %s3, 4
          %s237 = int_to_ptr.hbm [resolvable:$true] %s236
          %s238 = sshll.u32 [#allocation7], 4
          %s239 = int_to_ptr.vmem [resolvable:$true] %s238
          %244 = dma.hbm_to_vmem [thread:$0]  %s237, 2048, %s239, [#allocation6], 128, 128, 8
        $region24: #{tpu_custom_call.1} parent=11 // pred_fallthru
          _
        // Predicated region
        $region25: #{tpu_custom_call.1} parent=11 // pred_check
          %p245 = pneg %p131
        $region26: #{tpu_custom_call.1} parent=11 // pred_check_branch
          %247 = sbr.rel (%p245) target = $region28
        $region27: #{tpu_custom_call.1} parent=11 // pred_region
          _
        $region28: #{tpu_custom_call.1} parent=11 // pred_fallthru
          _
        // Predicated region
        $region29: #{tpu_custom_call.1} parent=11 // pred_check
          %p248 = pneg %p152
        $region30: #{tpu_custom_call.1} parent=11 // pred_check_branch
          %250 = sbr.rel (%p248) target = $region32
        $region31: #{tpu_custom_call.1} parent=11 // pred_region
          %252 = vsyncadd [#allocation9], 0
          %s253 = sshll.u32 %s5, 4
          %s254 = int_to_ptr.hbm [resolvable:$true] %s253
          %s255 = sshll.u32 [#allocation8], 4
          %s256 = int_to_ptr.vmem [resolvable:$true] %s255
          %261 = dma.hbm_to_vmem [thread:$0]  %s254, 2048, %s256, [#allocation9], 128, 128, 8
        $region32: #{tpu_custom_call.1} parent=11 // pred_fallthru
          _
        // Predicated region
        $region33: #{tpu_custom_call.1} parent=11 // pred_check
          %p262 = pneg %p173
        $region34: #{tpu_custom_call.1} parent=11 // pred_check_branch
          %264 = sbr.rel (%p262) target = $region36
        $region35: #{tpu_custom_call.1} parent=11 // pred_region
          _
        $region36: #{tpu_custom_call.1} parent=11 // pred_fallthru
          _
      $region12: #{tpu_custom_call.1} parent=5 // pred_fallthru
        _
      %p265 = scmp.lt.s32.totalorder %s21, 2
      // Predicated region
      $region37: #{tpu_custom_call.1} parent=5 // pred_check
        %p266 = pneg %p265
      $region38: #{tpu_custom_call.1} parent=5 // pred_check_branch
        %268 = sbr.rel (%p266) target = $region40
      $region39: #{tpu_custom_call.1} parent=5 // pred_region
        // Predicated region
        $region41: #{tpu_custom_call.1} parent=39 // pred_check
          %p269 = pneg %p41
        $region42: #{tpu_custom_call.1} parent=39 // pred_check_branch
          %271 = sbr.rel (%p269) target = $region44
        $region43: #{tpu_custom_call.1} parent=39 // pred_region
          %s272 = sand.u32 %s31, 1
          %s273 = scalar_lea.sflag [#allocation3], %s272
          %s274 = sand.u32 %s31, 1
          %s275 = smul.addr %s274, 104
          %s276 = scalar_lea.vmem [#allocation2], %s275
          %s277 = smul.u32 13, %s21
          %s278 = ssub.s32 25, %s277
          %p279 = scmp.lt.s32.totalorder %s278, 13
          %s280 = scalar_select %p279, %s278, 13
          %s281 = smul.u32 8, %s280
          %s282 = ssub.s32 104, %s281
          %s283 = sshll.u32 %s282, 4
          %284 = vsyncadd %s273, %s283
          %p285 = scmp.ne.s32.totalorder 0, %s281
          %s286 = smul.addr %s277, 8
          %s287 = scalar_lea.hbm %s0, %s286
          %s288 = smul.u32 8, %s280
          %s289 = sshll.u32 %s287, 4
          %s290 = int_to_ptr.hbm [resolvable:$true] %s289
          %s291 = sshll.u32 %s276, 4
          %s292 = int_to_ptr.vmem [resolvable:$true] %s291
          %s293 = sshll.u32 %s288, 4
          %297 = dma.hbm_to_vmem [thread:$0]  (%p285), %s290, %s293, %s292, %s273, 128, 128, 8
        $region44: #{tpu_custom_call.1} parent=39 // pred_fallthru
          _
      $region40: #{tpu_custom_call.1} parent=5 // pred_fallthru
        _
      %p298 = scmp.le.s32.totalorder 1, %s21
      %p299 = scmp.lt.s32.totalorder %s21, 3
      %p300 = pnand %p298, %p299
      %p301 = pneg %p300
      // Predicated region
      $region45: #{tpu_custom_call.1} parent=5 // pred_check
        _
      $region46: #{tpu_custom_call.1} parent=5 // pred_check_branch
        %303 = sbr.rel (%p300) target = $region48
      $region47: #{tpu_custom_call.1} parent=5 // pred_region
        %s304 = ssub.s32 %s21, 1
        %s305 = sand.u32 %s34, 1
        %s306 = scalar_lea.sflag [#allocation3], %s305
        %s307 = sand.u32 %s34, 1
        %s308 = smul.addr %s307, 104
        %s309 = scalar_lea.vmem [#allocation2], %s308
        // Predicated region
        $region49: #{tpu_custom_call.1} parent=47 // pred_check
          %p310 = pneg %p47
        $region50: #{tpu_custom_call.1} parent=47 // pred_check_branch
          %312 = sbr.rel (%p310) target = $region52
        $region51: #{tpu_custom_call.1} parent=47 // pred_region
          %314 = dma.done %s306, 1664
        $region52: #{tpu_custom_call.1} parent=47 // pred_fallthru
          _
        // Predicated region
        $region53: #{tpu_custom_call.1} parent=47 // pred_check
          %p315 = pneg %p68
        $region54: #{tpu_custom_call.1} parent=47 // pred_check_branch
          %317 = sbr.rel (%p315) target = $region56
        $region55: #{tpu_custom_call.1} parent=47 // pred_region
          %319 = dma.done [#allocation6], 2048
        $region56: #{tpu_custom_call.1} parent=47 // pred_fallthru
          _
        // Predicated region
        $region57: #{tpu_custom_call.1} parent=47 // pred_check
          %p320 = pneg %p110
        $region58: #{tpu_custom_call.1} parent=47 // pred_check_branch
          %322 = sbr.rel (%p320) target = $region60
        $region59: #{tpu_custom_call.1} parent=47 // pred_region
          %324 = dma.done [#allocation6], 2048
        $region60: #{tpu_custom_call.1} parent=47 // pred_fallthru
          _
        // Predicated region
        $region61: #{tpu_custom_call.1} parent=47 // pred_check
          %p325 = pneg %p152
        $region62: #{tpu_custom_call.1} parent=47 // pred_check_branch
          %327 = sbr.rel (%p325) target = $region64
        $region63: #{tpu_custom_call.1} parent=47 // pred_region
          %329 = dma.done [#allocation9], 2048
        $region64: #{tpu_custom_call.1} parent=47 // pred_fallthru
          _
        %s330 = sand.u32 %s34, 1
        %s331 = scalar_lea.sflag [#allocation3], %s330
        %s332 = sand.u32 %s34, 1
        %s333 = smul.addr %s332, 104
        %s334 = scalar_lea.vmem [#allocation2], %s333
        %p335 = pneg %p47
        %p336 = pneg %p44
        %p337 = pneg %p68
        %p338 = pneg %p65
        %p339 = pneg %p89
        %p340 = pneg %p86
        %p341 = pneg %p110
        %p342 = pneg %p107
        %p343 = pneg %p131
        %p344 = pneg %p128
        %p345 = pneg %p152
        %p346 = pneg %p149
        %p347 = pneg %p173
        %p348 = pneg %p170
        %p349 = pneg %p199
        %p350 = pneg %p196
        %s351 = sand.u32 %s186, 1
        %s352 = scalar_lea.sflag [#allocation4], %s351
        %s353 = sand.u32 %s186, 1
        %s354 = smul.addr %s353, 104
        %s355 = scalar_lea.vmem [#allocation10], %s354
        %s356 = smul.u32 13, %s26
        %s357 = ssub.s32 25, %s356
        %p358 = scmp.lt.s32.totalorder %s357, 13
        %s359 = scalar_select %p358, %s357, 13
        %s360 = smul.u32 8, %s359
        %s361 = smul.u32 13, %s26
        %s362 = ssub.s32 25, %s361
        %p363 = scmp.lt.s32.totalorder %s362, 13
        %s364 = scalar_select %p363, %s362, 13
        %s365 = smul.u32 8, %s364
        %v366 = vld [vmem:[%s309] sm:$0xff]
        %v367 = vld [vmem:[%s309 + $0x8] sm:$0xff]
        %v368 = vld [vmem:[%s309 + $0x10] sm:$0xff]
        %v369 = vld [vmem:[%s309 + $0x18] sm:$0xff]
        %v370 = vld [vmem:[%s309 + $0x20] sm:$0xff]
        %v371 = vld [vmem:[%s309 + $0x28] sm:$0xff]
        %v372 = vld [vmem:[%s309 + $0x30] sm:$0xff]
        %v373 = vld [vmem:[%s309 + $0x38] sm:$0xff]
        %v374 = vld [vmem:[%s309 + $0x40] sm:$0xff]
        %v375 = vld [vmem:[%s309 + $0x48] sm:$0xff]
        %v376 = vld [vmem:[%s309 + $0x50] sm:$0xff]
        %v377 = vld [vmem:[%s309 + $0x58] sm:$0xff]
        %v378 = vld [vmem:[%s309 + $0x60] sm:$0xff]
        %v379 = vld [vmem:[#allocation5] sm:$0xff]
        %v380 = vld [vmem:[#allocation5 + $0x8] sm:$0xff]
        %v381 = vld [vmem:[#allocation5 + $0x10] sm:$0xff]
        %v382 = vld [vmem:[#allocation5 + $0x18] sm:$0xff]
        %v383 = vld [vmem:[#allocation5 + $0x20] sm:$0xff]
        %v384 = vld [vmem:[#allocation5 + $0x28] sm:$0xff]
        %v385 = vld [vmem:[#allocation5 + $0x30] sm:$0xff]
        %v386 = vld [vmem:[#allocation5 + $0x38] sm:$0xff]
        %v387 = vld [vmem:[#allocation5 + $0x40] sm:$0xff]
        %v388 = vld [vmem:[#allocation5 + $0x48] sm:$0xff]
        %v389 = vld [vmem:[#allocation5 + $0x50] sm:$0xff]
        %v390 = vld [vmem:[#allocation5 + $0x58] sm:$0xff]
        %v391 = vld [vmem:[#allocation5 + $0x60] sm:$0xff]
        %v392 = vld [vmem:[#allocation5 + $0x68] sm:$0xff]
        %v393 = vld [vmem:[#allocation5 + $0x70] sm:$0xff]
        %v394 = vld [vmem:[#allocation5 + $0x78] sm:$0xff]
        %v395 = vld [vmem:[%s2] sm:$0x1]
        %v397 = vperm.slane %v395, 0
        %399 = vmatpush.msra.mxu0 %v394
        %400 = vmatpush.msra.mxu0 %v393
        %401 = vmatpush.msra.mxu0 %v392
        %402 = vmatpush.msra.mxu0 %v391
        %403 = vmatpush.msra.mxu0 %v390
        %404 = vmatpush.msra.mxu0 %v389
        %405 = vmatpush.msra.mxu0 %v388
        %406 = vmatpush.msra.mxu0 %v387
        %407 = vmatpush.msra.mxu0 %v386
        %408 = vmatpush.msra.mxu0 %v385
        %409 = vmatpush.msra.mxu0 %v384
        %410 = vmatpush.msra.mxu0 %v383
        %411 = vmatpush.msra.mxu0 %v382
        %412 = vmatpush.msra.mxu0 %v381
        %413 = vmatpush.msra.mxu0 %v380
        %414 = vmatpush.msra.mxu0 %v379
        %415 = vmatmul.f32.gmra.mxu0 %v366
        %v416 = vpop.f32.mrf.mxu0
        %v417 = vadd.f32 %v397, %v416
        %418 = vmatmul.f32.gmra.mxu0 %v367
        %v419 = vpop.f32.mrf.mxu0
        %v420 = vadd.f32 %v397, %v419
        %421 = vmatmul.f32.gmra.mxu0 %v368
        %v422 = vpop.f32.mrf.mxu0
        %v423 = vadd.f32 %v397, %v422
        %424 = vmatmul.f32.gmra.mxu0 %v369
        %v425 = vpop.f32.mrf.mxu0
        %v426 = vadd.f32 %v397, %v425
        %427 = vmatmul.f32.gmra.mxu0 %v370
        %v428 = vpop.f32.mrf.mxu0
        %v429 = vadd.f32 %v397, %v428
        %430 = vmatmul.f32.gmra.mxu0 %v371
        %v431 = vpop.f32.mrf.mxu0
        %v432 = vadd.f32 %v397, %v431
        %433 = vmatmul.f32.gmra.mxu0 %v372
        %v434 = vpop.f32.mrf.mxu0
        %v435 = vadd.f32 %v397, %v434
        %436 = vmatmul.f32.gmra.mxu0 %v373
        %v437 = vpop.f32.mrf.mxu0
        %v438 = vadd.f32 %v397, %v437
        %439 = vmatmul.f32.gmra.mxu0 %v374
        %v440 = vpop.f32.mrf.mxu0
        %v441 = vadd.f32 %v397, %v440
        %442 = vmatmul.f32.gmra.mxu0 %v375
        %v443 = vpop.f32.mrf.mxu0
        %v444 = vadd.f32 %v397, %v443
        %445 = vmatmul.f32.gmra.mxu0 %v376
        %v446 = vpop.f32.mrf.mxu0
        %v447 = vadd.f32 %v397, %v446
        %448 = vmatmul.f32.gmra.mxu0 %v377
        %v449 = vpop.f32.mrf.mxu0
        %v450 = vadd.f32 %v397, %v449
        %451 = vmatmul.f32.gmra.mxu0 %v378
        %v452 = vpop.f32.mrf.mxu0
        %v453 = vadd.f32 %v397, %v452
        %454 = vdwg.mxu0
        %v455 = vmax.f32 %v417, 0.0
        %v456 = vmax.f32 %v420, 0.0
        %v457 = vmax.f32 %v423, 0.0
        %v458 = vmax.f32 %v426, 0.0
        %v459 = vmax.f32 %v429, 0.0
        %v460 = vmax.f32 %v432, 0.0
        %v461 = vmax.f32 %v435, 0.0
        %v462 = vmax.f32 %v438, 0.0
        %v463 = vmax.f32 %v441, 0.0
        %v464 = vmax.f32 %v444, 0.0
        %v465 = vmax.f32 %v447, 0.0
        %v466 = vmax.f32 %v450, 0.0
        %v467 = vmax.f32 %v453, 0.0
        %v468 = vld [vmem:[#allocation7] sm:$0xff]
        %v469 = vld [vmem:[#allocation7 + $0x8] sm:$0xff]
        %v470 = vld [vmem:[#allocation7 + $0x10] sm:$0xff]
        %v471 = vld [vmem:[#allocation7 + $0x18] sm:$0xff]
        %v472 = vld [vmem:[#allocation7 + $0x20] sm:$0xff]
        %v473 = vld [vmem:[#allocation7 + $0x28] sm:$0xff]
        %v474 = vld [vmem:[#allocation7 + $0x30] sm:$0xff]
        %v475 = vld [vmem:[#allocation7 + $0x38] sm:$0xff]
        %v476 = vld [vmem:[#allocation7 + $0x40] sm:$0xff]
        %v477 = vld [vmem:[#allocation7 + $0x48] sm:$0xff]
        %v478 = vld [vmem:[#allocation7 + $0x50] sm:$0xff]
        %v479 = vld [vmem:[#allocation7 + $0x58] sm:$0xff]
        %v480 = vld [vmem:[#allocation7 + $0x60] sm:$0xff]
        %v481 = vld [vmem:[#allocation7 + $0x68] sm:$0xff]
        %v482 = vld [vmem:[#allocation7 + $0x70] sm:$0xff]
        %v483 = vld [vmem:[#allocation7 + $0x78] sm:$0xff]
        %v484 = vld [vmem:[%s4] sm:$0x1]
        %v486 = vperm.slane %v484, 0
        %488 = vmatpush.msra.mxu0 %v483
        %489 = vmatpush.msra.mxu0 %v482
        %490 = vmatpush.msra.mxu0 %v481
        %491 = vmatpush.msra.mxu0 %v480
        %492 = vmatpush.msra.mxu0 %v479
        %493 = vmatpush.msra.mxu0 %v478
        %494 = vmatpush.msra.mxu0 %v477
        %495 = vmatpush.msra.mxu0 %v476
        %496 = vmatpush.msra.mxu0 %v475
        %497 = vmatpush.msra.mxu0 %v474
        %498 = vmatpush.msra.mxu0 %v473
        %499 = vmatpush.msra.mxu0 %v472
        %500 = vmatpush.msra.mxu0 %v471
        %501 = vmatpush.msra.mxu0 %v470
        %502 = vmatpush.msra.mxu0 %v469
        %503 = vmatpush.msra.mxu0 %v468
        %504 = vmatmul.f32.gmra.mxu0 %v455
        %v505 = vpop.f32.mrf.mxu0
        %v506 = vadd.f32 %v486, %v505
        %507 = vmatmul.f32.gmra.mxu0 %v456
        %v508 = vpop.f32.mrf.mxu0
        %v509 = vadd.f32 %v486, %v508
        %510 = vmatmul.f32.gmra.mxu0 %v457
        %v511 = vpop.f32.mrf.mxu0
        %v512 = vadd.f32 %v486, %v511
        %513 = vmatmul.f32.gmra.mxu0 %v458
        %v514 = vpop.f32.mrf.mxu0
        %v515 = vadd.f32 %v486, %v514
        %516 = vmatmul.f32.gmra.mxu0 %v459
        %v517 = vpop.f32.mrf.mxu0
        %v518 = vadd.f32 %v486, %v517
        %519 = vmatmul.f32.gmra.mxu0 %v460
        %v520 = vpop.f32.mrf.mxu0
        %v521 = vadd.f32 %v486, %v520
        %522 = vmatmul.f32.gmra.mxu0 %v461
        %v523 = vpop.f32.mrf.mxu0
        %v524 = vadd.f32 %v486, %v523
        %525 = vmatmul.f32.gmra.mxu0 %v462
        %v526 = vpop.f32.mrf.mxu0
        %v527 = vadd.f32 %v486, %v526
        %528 = vmatmul.f32.gmra.mxu0 %v463
        %v529 = vpop.f32.mrf.mxu0
        %v530 = vadd.f32 %v486, %v529
        %531 = vmatmul.f32.gmra.mxu0 %v464
        %v532 = vpop.f32.mrf.mxu0
        %v533 = vadd.f32 %v486, %v532
        %534 = vmatmul.f32.gmra.mxu0 %v465
        %v535 = vpop.f32.mrf.mxu0
        %v536 = vadd.f32 %v486, %v535
        %537 = vmatmul.f32.gmra.mxu0 %v466
        %v538 = vpop.f32.mrf.mxu0
        %v539 = vadd.f32 %v486, %v538
        %540 = vmatmul.f32.gmra.mxu0 %v467
        %v541 = vpop.f32.mrf.mxu0
        %v542 = vadd.f32 %v486, %v541
        %543 = vdwg.mxu0
        %v544 = vmax.f32 %v506, 0.0
        %v545 = vmax.f32 %v509, 0.0
        %v546 = vmax.f32 %v512, 0.0
        %v547 = vmax.f32 %v515, 0.0
        %v548 = vmax.f32 %v518, 0.0
        %v549 = vmax.f32 %v521, 0.0
        %v550 = vmax.f32 %v524, 0.0
        %v551 = vmax.f32 %v527, 0.0
        %v552 = vmax.f32 %v530, 0.0
        %v553 = vmax.f32 %v533, 0.0
        %v554 = vmax.f32 %v536, 0.0
        %v555 = vmax.f32 %v539, 0.0
        %v556 = vmax.f32 %v542, 0.0
        %v557 = vld [vmem:[#allocation8] sm:$0xff]
        %v558 = vld [vmem:[#allocation8 + $0x8] sm:$0xff]
        %v559 = vld [vmem:[#allocation8 + $0x10] sm:$0xff]
        %v560 = vld [vmem:[#allocation8 + $0x18] sm:$0xff]
        %v561 = vld [vmem:[#allocation8 + $0x20] sm:$0xff]
        %v562 = vld [vmem:[#allocation8 + $0x28] sm:$0xff]
        %v563 = vld [vmem:[#allocation8 + $0x30] sm:$0xff]
        %v564 = vld [vmem:[#allocation8 + $0x38] sm:$0xff]
        %v565 = vld [vmem:[#allocation8 + $0x40] sm:$0xff]
        %v566 = vld [vmem:[#allocation8 + $0x48] sm:$0xff]
        %v567 = vld [vmem:[#allocation8 + $0x50] sm:$0xff]
        %v568 = vld [vmem:[#allocation8 + $0x58] sm:$0xff]
        %v569 = vld [vmem:[#allocation8 + $0x60] sm:$0xff]
        %v570 = vld [vmem:[#allocation8 + $0x68] sm:$0xff]
        %v571 = vld [vmem:[#allocation8 + $0x70] sm:$0xff]
        %v572 = vld [vmem:[#allocation8 + $0x78] sm:$0xff]
        %v573 = vld [vmem:[%s6] sm:$0x1]
        %v575 = vperm.slane %v573, 0
        %577 = vmatpush.msra.mxu0 %v572
        %578 = vmatpush.msra.mxu0 %v571
        %579 = vmatpush.msra.mxu0 %v570
        %580 = vmatpush.msra.mxu0 %v569
        %581 = vmatpush.msra.mxu0 %v568
        %582 = vmatpush.msra.mxu0 %v567
        %583 = vmatpush.msra.mxu0 %v566
        %584 = vmatpush.msra.mxu0 %v565
        %585 = vmatpush.msra.mxu0 %v564
        %586 = vmatpush.msra.mxu0 %v563
        %587 = vmatpush.msra.mxu0 %v562
        %588 = vmatpush.msra.mxu0 %v561
        %589 = vmatpush.msra.mxu0 %v560
        %590 = vmatpush.msra.mxu0 %v559
        %591 = vmatpush.msra.mxu0 %v558
        %592 = vmatpush.msra.mxu0 %v557
        %593 = vmatmul.f32.gmra.mxu0 %v544
        %v594 = vpop.f32.mrf.mxu0
        %v595 = vadd.f32 %v575, %v594
        %596 = vmatmul.f32.gmra.mxu0 %v545
        %v597 = vpop.f32.mrf.mxu0
        %v598 = vadd.f32 %v575, %v597
        %599 = vmatmul.f32.gmra.mxu0 %v546
        %v600 = vpop.f32.mrf.mxu0
        %v601 = vadd.f32 %v575, %v600
        %602 = vmatmul.f32.gmra.mxu0 %v547
        %v603 = vpop.f32.mrf.mxu0
        %v604 = vadd.f32 %v575, %v603
        %605 = vmatmul.f32.gmra.mxu0 %v548
        %v606 = vpop.f32.mrf.mxu0
        %v607 = vadd.f32 %v575, %v606
        %608 = vmatmul.f32.gmra.mxu0 %v549
        %v609 = vpop.f32.mrf.mxu0
        %v610 = vadd.f32 %v575, %v609
        %611 = vmatmul.f32.gmra.mxu0 %v550
        %v612 = vpop.f32.mrf.mxu0
        %v613 = vadd.f32 %v575, %v612
        %614 = vmatmul.f32.gmra.mxu0 %v551
        %v615 = vpop.f32.mrf.mxu0
        %v616 = vadd.f32 %v575, %v615
        %617 = vmatmul.f32.gmra.mxu0 %v552
        %v618 = vpop.f32.mrf.mxu0
        %v619 = vadd.f32 %v575, %v618
        %620 = vmatmul.f32.gmra.mxu0 %v553
        %v621 = vpop.f32.mrf.mxu0
        %v622 = vadd.f32 %v575, %v621
        %623 = vmatmul.f32.gmra.mxu0 %v554
        %v624 = vpop.f32.mrf.mxu0
        %v625 = vadd.f32 %v575, %v624
        %626 = vmatmul.f32.gmra.mxu0 %v555
        %v627 = vpop.f32.mrf.mxu0
        %v628 = vadd.f32 %v575, %v627
        %629 = vmatmul.f32.gmra.mxu0 %v556
        %v630 = vpop.f32.mrf.mxu0
        %v631 = vadd.f32 %v575, %v630
        %632 = vdwg.mxu0
        %633 = vst [vmem:[%s355] sm:$0xff] %v595
        %634 = vst [vmem:[%s355 + $0x8] sm:$0xff] %v598
        %635 = vst [vmem:[%s355 + $0x10] sm:$0xff] %v601
        %636 = vst [vmem:[%s355 + $0x18] sm:$0xff] %v604
        %637 = vst [vmem:[%s355 + $0x20] sm:$0xff] %v607
        %638 = vst [vmem:[%s355 + $0x28] sm:$0xff] %v610
        %639 = vst [vmem:[%s355 + $0x30] sm:$0xff] %v613
        %640 = vst [vmem:[%s355 + $0x38] sm:$0xff] %v616
        %641 = vst [vmem:[%s355 + $0x40] sm:$0xff] %v619
        %642 = vst [vmem:[%s355 + $0x48] sm:$0xff] %v622
        %643 = vst [vmem:[%s355 + $0x50] sm:$0xff] %v625
        %644 = vst [vmem:[%s355 + $0x58] sm:$0xff] %v628
        %645 = vst [vmem:[%s355 + $0x60] sm:$0xff] %v631
        %s646 = sand.u32 %s186, 1
        %s647 = scalar_lea.sflag [#allocation4], %s646
        %s648 = sand.u32 %s186, 1
        %s649 = smul.addr %s648, 104
        %s650 = scalar_lea.vmem [#allocation10], %s649
        // Predicated region
        $region65: #{tpu_custom_call.1} parent=47 // pred_check
          %p651 = pneg %p196
        $region66: #{tpu_custom_call.1} parent=47 // pred_check_branch
          %653 = sbr.rel (%p651) target = $region68
        $region67: #{tpu_custom_call.1} parent=47 // pred_region
          %s654 = smul.u32 13, %s26
          %s655 = ssub.s32 25, %s654
          %p656 = scmp.lt.s32.totalorder %s655, 13
          %s657 = scalar_select %p656, %s655, 13
          %s658 = smul.u32 8, %s657
          %s659 = ssub.s32 104, %s658
          %s660 = sshll.u32 %s659, 4
          %661 = vsyncadd %s647, %s660
          %p662 = scmp.ne.s32.totalorder 0, %s658
          %s663 = smul.addr %s654, 8
          %s664 = scalar_lea.hbm %s7, %s663
          %s665 = smul.u32 8, %s657
          %s666 = sshll.u32 %s650, 4
          %s667 = int_to_ptr.vmem [resolvable:$true] %s666
          %s668 = sshll.u32 %s664, 4
          %s669 = int_to_ptr.hbm [resolvable:$true] %s668
          %s670 = sshll.u32 %s665, 4
          %674 = dma.vmem_to_hbm [thread:$0]  (%p662), %s667, %s670, %s669, %s647, 128, 128, 8
        $region68: #{tpu_custom_call.1} parent=47 // pred_fallthru
          _
      $region48: #{tpu_custom_call.1} parent=5 // pred_fallthru
        _
      %p675 = scmp.le.s32.totalorder 2, %s21
      // Predicated region
      $region69: #{tpu_custom_call.1} parent=5 // pred_check
        %p676 = pneg %p675
      $region70: #{tpu_custom_call.1} parent=5 // pred_check_branch
        %678 = sbr.rel (%p676) target = $region72
      $region71: #{tpu_custom_call.1} parent=5 // pred_region
        %s679 = ssub.s32 %s21, 2
        // Predicated region
        $region73: #{tpu_custom_call.1} parent=71 // pred_check
          %p680 = pneg %p202
        $region74: #{tpu_custom_call.1} parent=71 // pred_check_branch
          %682 = sbr.rel (%p680) target = $region76
        $region75: #{tpu_custom_call.1} parent=71 // pred_region
          %s683 = sand.u32 %s187, 1
          %s684 = scalar_lea.sflag [#allocation4], %s683
          %s685 = sand.u32 %s187, 1
          %s686 = smul.addr %s685, 104
          %s687 = scalar_lea.vmem [#allocation10], %s686
          %689 = dma.done %s684, 1664
        $region76: #{tpu_custom_call.1} parent=71 // pred_fallthru
          _
      $region72: #{tpu_custom_call.1} parent=5 // pred_fallthru
        _
    $region6: #{tpu_custom_call.1} parent=1 // loop_footer
      %s25 = sadd.s32 1, %s21
    $region7: #{tpu_custom_call.1} parent=1 // loop_footer_branch
      %20 = sbr.rel target = $region3
    $region8: #{tpu_custom_call.1} parent=1 // loop_exit
      _
    %690 = vsyncpa [#allocation3], 1
    %s691 = scalar_lea.sflag [#allocation3], 1
    %692 = vsyncpa %s691, 1
    %693 = vsyncpa [#allocation6], 1
    %694 = vsyncpa [#allocation9], 1
    %695 = vsyncpa [#allocation4], 1
    %s696 = scalar_lea.sflag [#allocation4], 1
    %697 = vsyncpa %s696, 1

</llo_original>
